<compile_context>
chip_gen: v7x
topology: tpu7x:2x2x1
jax: 0.10.0
libtpu: 0.0.40
codegen_flags: <defaults>
</compile_context>

<pallas_src>
import math

import jax
import jax.numpy as jnp
from jax import lax
from jax.experimental import pallas as pl
from jax.experimental.pallas import tpu as pltpu

# ---------------- model hyper-parameters (synthetic "tiny" Chronos) -----------
B = 2          # batch (number of series)
T = 16         # context length
D = 128        # model dim
F = 256        # FFN dim
V = 256        # value-vocabulary size (quantization bins)
P = 8          # prediction_length

BT = B * T
BP = B * P

assert (T & (T - 1)) == 0 and (P & (P - 1)) == 0
LOG_T = T.bit_length() - 1
LOG_P = P.bit_length() - 1

QLOW, QHIGH = -15.0, 15.0          # Chronos quantization range (after mean scaling)
BIN_W = (QHIGH - QLOW) / V
NEG_INF = -1e30


def _softmax(s):
    m = jnp.max(s, axis=-1, keepdims=True)
    e = jnp.exp(s - m)
    return e * pl.reciprocal(jnp.sum(e, axis=-1, keepdims=True), approx=True)


def chronos_kernel(y_ref, femb_ref, wo_ref, w1_ref, w2_ref, qd_ref, wkv_ref, wov_ref,
                   out_ref):
    """Full forward: scale -> tokenize -> embed+QKV -> encoder -> decoder -> forecast."""
    inv_sqrt_d = 1.0 / math.sqrt(D)

    # ---- mean-scale the raw context series (Chronos pre-processing) ----------
    y = y_ref[...]                                                    # (B, T) f32
    scale = jnp.mean(jnp.abs(y), axis=1, keepdims=True) + 1e-6        # (B, 1)
    y_scaled = y / scale                                              # (B, T)

    # ---- flatten (B, T) -> (BT, 1) with a tiny selection matmul (2D-safe) ----
    sel_b = ((lax.broadcasted_iota(jnp.int32, (BT, B), 0) >> LOG_T) ==
             lax.broadcasted_iota(jnp.int32, (BT, B), 1)).astype(jnp.float32)   # (BT, B)
    sel_t = ((lax.broadcasted_iota(jnp.int32, (BT, T), 0) & (T - 1)) ==
             lax.broadcasted_iota(jnp.int32, (BT, T), 1)).astype(jnp.float32)   # (BT, T)
    y_rows = jnp.dot(sel_b, y_scaled, preferred_element_type=jnp.float32)       # (BT, T)
    y_flat = jnp.sum(y_rows * sel_t, axis=-1, keepdims=True)                    # (BT, 1)

    # ---- tokenize: quantize scaled values into V bins -------------------------
    tok = jnp.clip(jnp.floor((y_flat - QLOW) / BIN_W), 0, V - 1).astype(jnp.int32)

    # ---- fused embed + QKV: one one-hot matmul against [emb|embWq|embWk|embWv]
    iota_v = lax.broadcasted_iota(jnp.int32, (BT, V), 1)
    onehot = (iota_v == tok).astype(jnp.bfloat16)                     # (BT, V)
    xqkv = jnp.dot(onehot, femb_ref[...],
                   preferred_element_type=jnp.float32)                # (BT, 4D) f32
    x = xqkv[:, :D]                                                   # f32 (residual path)
    xqkv_bf = xqkv.astype(jnp.bfloat16)                               # single cast, reused
    q = xqkv_bf[:, D:2 * D]
    k = xqkv_bf[:, 2 * D:3 * D]
    v = xqkv_bf[:, 3 * D:4 * D]

    # ---- encoder: single-head self-attention, all series batched --------------
    s = lax.dot_general(q, k, (((1,), (1,)), ((), ())),
                        preferred_element_type=jnp.float32) * inv_sqrt_d        # (BT, BT)
    same_series = ((lax.broadcasted_iota(jnp.int32, (BT, BT), 0) >> LOG_T) ==
                   (lax.broadcasted_iota(jnp.int32, (BT, BT), 1) >> LOG_T))
    s = jnp.where(same_series, s, NEG_INF)                            # block-diag mask
    p = _softmax(s)                                                   # f32
    attn = jnp.dot(p.astype(jnp.bfloat16), v,
                   preferred_element_type=jnp.float32)                # (BT, D)
    h = x + jnp.dot(attn.astype(jnp.bfloat16), wo_ref[...],
                    preferred_element_type=jnp.float32)

    # ---- encoder FFN (T5 uses ReLU) --------------------------------------------
    f = jnp.maximum(jnp.dot(h.astype(jnp.bfloat16), w1_ref[...],
                            preferred_element_type=jnp.float32), 0.0)           # (BT, F)
    h = h + jnp.dot(f.astype(jnp.bfloat16), w2_ref[...],
                    preferred_element_type=jnp.float32)

    # ---- decoder: precomputed step queries cross-attend to own-series encoder --
    h_bf = h.astype(jnp.bfloat16)
    kv = jnp.dot(h_bf, wkv_ref[...], preferred_element_type=jnp.float32)        # (BT, 2D)
    kv_bf = kv.astype(jnp.bfloat16)
    kd = kv_bf[:, :D]
    vd = kv_bf[:, D:]
    qd = qd_ref[...]                                                  # (BP, D) bf16
    sd = lax.dot_general(qd, kd, (((1,), (1,)), ((), ())),
                         preferred_element_type=jnp.float32) * inv_sqrt_d       # (BP, BT)
    same_series_d = ((lax.broadcasted_iota(jnp.int32, (BP, BT), 0) >> LOG_P) ==
                     (lax.broadcasted_iota(jnp.int32, (BP, BT), 1) >> LOG_T))
    sd = jnp.where(same_series_d, sd, NEG_INF)
    pd = _softmax(sd)
    ad = jnp.dot(pd.astype(jnp.bfloat16), vd,
                 preferred_element_type=jnp.float32)                  # (BP, D)

    # ---- fused (Wo_dec @ Wvoc) projection + greedy argmax + dequantize ---------
    logits = jnp.dot(ad.astype(jnp.bfloat16), wov_ref[...],
                     preferred_element_type=jnp.float32)              # (BP, V)
    m = jnp.max(logits, axis=-1, keepdims=True)
    idxf = lax.broadcasted_iota(jnp.int32, (BP, V), 1).astype(jnp.float32)
    tokf = jnp.min(jnp.where(logits >= m, idxf, float(V)),
                   axis=-1, keepdims=True)                            # (BP, 1) f32
    val = QLOW + (tokf + 0.5) * BIN_W                                 # dequantized, (BP, 1)

    # ---- un-flatten (BP,1) -> (B,P) with selection matmul, un-scale, store -----
    sel_out_p = ((lax.broadcasted_iota(jnp.int32, (BP, P), 0) & (P - 1)) ==
                 lax.broadcasted_iota(jnp.int32, (BP, P), 1)).astype(jnp.float32)  # (BP, P)
    sel_out_b = ((lax.broadcasted_iota(jnp.int32, (B, BP), 1) >> LOG_P) ==
                 lax.broadcasted_iota(jnp.int32, (B, BP), 0)).astype(jnp.float32)  # (B, BP)
    out = jnp.dot(sel_out_b, val * sel_out_p,
                  preferred_element_type=jnp.float32)                 # (B, P)
    out_ref[...] = out * scale                                        # lane-dense (B, P) f32


# ----------------------------- host-side wrapper -------------------------------
_FLOPS = 2 * (BT * B * T + BT * V * 4 * D + BT * BT * D + BT * D * BT + BT * D * D
              + BT * D * F + BT * F * D + BT * D * 2 * D + BP * BT * D + BP * D * BT
              + BP * D * V + B * BP * P)
_TRANS = BT * BT + BP * BT + BT + BP + B
_BYTES = (B * T * 4 + V * 4 * D * 2 + 3 * D * D * 2 + D * F * 2 + F * D * 2
          + BP * D * 2 + D * 2 * D * 2 + D * V * 2 + B * P * 4)

_VMEM_SPEC = pl.BlockSpec(memory_space=pltpu.MemorySpace.VMEM)


def chronos_forward(y, folded):
    # Single invocation (no grid): all folded weights (~0.6 MB bf16) stay resident
    # in VMEM for the whole call; no pipeline-step overhead, no double-buffering.
    return pl.pallas_call(
        chronos_kernel,
        out_shape=jax.ShapeDtypeStruct((B, P), jnp.float32),
        in_specs=[_VMEM_SPEC] * (1 + len(folded)),
        out_specs=_VMEM_SPEC,
        cost_estimate=pl.CostEstimate(flops=_FLOPS, transcendentals=_TRANS,
                                      bytes_accessed=_BYTES),
    )(y, *folded)


@jax.jit
def chronos_predict(y, folded):
    """Context series y [B, T] f32 -> forecast [B, P] f32 (one TPU dispatch)."""
    return chronos_forward(y, folded)


# ----------------------------- parameters --------------------------------------
def init_params(key):
    ks = jax.random.split(key, 13)
    n = lambda k, shape, s: jax.random.normal(k, shape, jnp.float32) * s
    return dict(
        emb=n(ks[0], (V, D), 0.02),
        wq=n(ks[1], (D, D), 1.0 / math.sqrt(D)),
        wk=n(ks[2], (D, D), 1.0 / math.sqrt(D)),
        wv=n(ks[3], (D, D), 1.0 / math.sqrt(D)),
        wo=n(ks[4], (D, D), 1.0 / math.sqrt(D)),
        w1=n(ks[5], (D, F), 1.0 / math.sqrt(D)),
        w2=n(ks[6], (F, D), 1.0 / math.sqrt(F)),
        qdec=n(ks[7], (P, D), 0.02),
        wq_dec=n(ks[8], (D, D), 1.0 / math.sqrt(D)),
        wk_dec=n(ks[9], (D, D), 1.0 / math.sqrt(D)),
        wv_dec=n(ks[10], (D, D), 1.0 / math.sqrt(D)),
        wo_dec=n(ks[11], (D, D), 1.0 / math.sqrt(D)),
        wvoc=n(ks[12], (D, V), 1.0 / math.sqrt(D)),
    )


def fold_params(p):
    """Constant-fold weights in f32, cast to bf16 once (no stacked bf16 rounding)."""
    femb = jnp.concatenate(
        [p["emb"], p["emb"] @ p["wq"], p["emb"] @ p["wk"], p["emb"] @ p["wv"]], axis=1)
    wkv_dec = jnp.concatenate([p["wk_dec"], p["wv_dec"]], axis=1)     # (D, 2D)
    wov = p["wo_dec"] @ p["wvoc"]                                     # (D, V)
    qd = jnp.tile(p["qdec"] @ p["wq_dec"], (B, 1))                    # (BP, D)
    bf = lambda a: a.astype(jnp.bfloat16)
    return (bf(femb), bf(p["wo"]), bf(p["w1"]), bf(p["w2"]),
            bf(qd), bf(wkv_dec), bf(wov))


if __name__ == "__main__":
    key = jax.random.PRNGKey(0)
    k_w, k_x = jax.random.split(key)
    params = init_params(k_w)
    folded = fold_params(params)

    # deterministic synthetic context series [B, T]: sinusoid + noise
    t = jnp.arange(T, dtype=jnp.float32)
    base = jnp.stack([jnp.sin(0.5 * t) * 3.0 + 10.0,
                      jnp.cos(0.3 * t) * 2.0 - 5.0])
    y = base + 0.1 * jax.random.normal(k_x, (B, T), jnp.float32)

    forecast = chronos_predict(y, folded)
    jax.block_until_ready(forecast)
    assert forecast.shape == (B, P) and forecast.dtype == jnp.float32
    assert bool(jnp.all(jnp.isfinite(forecast)))
    print("KERNEL_OK")
</pallas_src>

<mosaic_0001>
module attributes {stable_mosaic.version = 11 : i64} {
  func.func @chronos_kernel(%arg0: memref<2x16xf32, #tpu.memory_space<vmem>>, %arg1: memref<256x512xbf16, #tpu.memory_space<vmem>>, %arg2: memref<128x128xbf16, #tpu.memory_space<vmem>>, %arg3: memref<128x256xbf16, #tpu.memory_space<vmem>>, %arg4: memref<256x128xbf16, #tpu.memory_space<vmem>>, %arg5: memref<16x128xbf16, #tpu.memory_space<vmem>>, %arg6: memref<128x256xbf16, #tpu.memory_space<vmem>>, %arg7: memref<128x256xbf16, #tpu.memory_space<vmem>>, %arg8: memref<2x8xf32, #tpu.memory_space<vmem>>) attributes {dimension_semantics = [], scalar_prefetch = 0 : i64, scratch_operands = 0 : i64, tpu.core_type = #tpu.core_type<tc>} {
    %c0 = arith.constant 0 : index
    %c0_0 = arith.constant 0 : index
    %0 = vector.load %arg0[%c0, %c0_0] : memref<2x16xf32, #tpu.memory_space<vmem>>, vector<2x16xf32>
    %1 = math.absf %0 : vector<2x16xf32>
    %cst = arith.constant dense<0.000000e+00> : vector<2xf32>
    %2 = vector.multi_reduction <add>, %1, %cst [1] : vector<2x16xf32> to vector<2xf32>
    %3 = vector.shape_cast %2 : vector<2xf32> to vector<2x1xf32>
    %cst_1 = arith.constant 1.600000e+01 : f32
    %4 = vector.broadcast %cst_1 : f32 to vector<2x1xf32>
    %5 = arith.divf %3, %4 : vector<2x1xf32>
    %cst_2 = arith.constant 9.99999997E-7 : f32
    %6 = vector.broadcast %cst_2 : f32 to vector<2x1xf32>
    %7 = arith.addf %5, %6 : vector<2x1xf32>
    %8 = vector.broadcast %7 : vector<2x1xf32> to vector<2x16xf32>
    %9 = arith.divf %0, %8 : vector<2x16xf32>
    %10 = tpu.iota {dimensions = array<i32: 0>} : vector<32x2xi32>
    %c4_i32 = arith.constant 4 : i32
    %11 = vector.broadcast %c4_i32 : i32 to vector<32x2xi32>
    %12 = arith.shrsi %10, %11 : vector<32x2xi32>
    %13 = tpu.iota {dimensions = array<i32: 1>} : vector<32x2xi32>
    %14 = arith.cmpi eq, %12, %13 : vector<32x2xi32>
    %15 = arith.extui %14 : vector<32x2xi1> to vector<32x2xi32>
    %16 = arith.sitofp %15 : vector<32x2xi32> to vector<32x2xf32>
    %17 = tpu.iota {dimensions = array<i32: 0>} : vector<32x16xi32>
    %c15_i32 = arith.constant 15 : i32
    %18 = vector.broadcast %c15_i32 : i32 to vector<32x16xi32>
    %19 = arith.andi %17, %18 : vector<32x16xi32>
    %20 = tpu.iota {dimensions = array<i32: 1>} : vector<32x16xi32>
    %21 = arith.cmpi eq, %19, %20 : vector<32x16xi32>
    %22 = arith.extui %21 : vector<32x16xi1> to vector<32x16xi32>
    %23 = arith.sitofp %22 : vector<32x16xi32> to vector<32x16xf32>
    %cst_3 = arith.constant dense<0.000000e+00> : vector<32x16xf32>
    %24 = tpu.matmul %16, %9, %cst_3 {dimension_numbers = #tpu.dot_dimension_numbers<[1], [0], [0], [1], [0, 0, 1, 1], [], []>} : vector<32x2xf32>, vector<2x16xf32>, vector<32x16xf32> -> vector<32x16xf32>
    %25 = arith.mulf %24, %23 : vector<32x16xf32>
    %cst_4 = arith.constant dense<0.000000e+00> : vector<32xf32>
    %26 = vector.multi_reduction <add>, %25, %cst_4 [1] : vector<32x16xf32> to vector<32xf32>
    %27 = vector.shape_cast %26 : vector<32xf32> to vector<32x1xf32>
    %cst_5 = arith.constant -1.500000e+01 : f32
    %28 = vector.broadcast %cst_5 : f32 to vector<32x1xf32>
    %29 = arith.subf %27, %28 : vector<32x1xf32>
    %cst_6 = arith.constant 0.1171875 : f32
    %30 = vector.broadcast %cst_6 : f32 to vector<32x1xf32>
    %31 = arith.divf %29, %30 : vector<32x1xf32>
    %32 = math.floor %31 : vector<32x1xf32>
    %c0_i32 = arith.constant 0 : i32
    %c255_i32 = arith.constant 255 : i32
    %33 = arith.sitofp %c0_i32 : i32 to f32
    %34 = vector.broadcast %33 : f32 to vector<32x1xf32>
    %35 = arith.maximumf %34, %32 : vector<32x1xf32>
    %36 = arith.sitofp %c255_i32 : i32 to f32
    %37 = vector.broadcast %36 : f32 to vector<32x1xf32>
    %38 = arith.minimumf %37, %35 : vector<32x1xf32>
    %39 = arith.fptosi %38 : vector<32x1xf32> to vector<32x1xi32>
    %40 = tpu.iota {dimensions = array<i32: 1>} : vector<32x256xi32>
    %41 = vector.broadcast %39 : vector<32x1xi32> to vector<32x256xi32>
    %42 = arith.cmpi eq, %40, %41 : vector<32x256xi32>
    %43 = arith.extui %42 : vector<32x256xi1> to vector<32x256xi32>
    %44 = arith.sitofp %43 : vector<32x256xi32> to vector<32x256xf32>
    %45 = arith.truncf %44 : vector<32x256xf32> to vector<32x256xbf16>
    %c0_7 = arith.constant 0 : index
    %c0_8 = arith.constant 0 : index
    %46 = vector.load %arg1[%c0_7, %c0_8] : memref<256x512xbf16, #tpu.memory_space<vmem>>, vector<256x512xbf16>
    %cst_9 = arith.constant dense<0.000000e+00> : vector<32x512xf32>
    %47 = tpu.matmul %45, %46, %cst_9 {dimension_numbers = #tpu.dot_dimension_numbers<[1], [0], [0], [1], [0, 0, 1, 1], [], []>} : vector<32x256xbf16>, vector<256x512xbf16>, vector<32x512xf32> -> vector<32x512xf32>
    %48 = vector.extract_strided_slice %47 {offsets = [0, 0], sizes = [32, 128], strides = [1, 1]} : vector<32x512xf32> to vector<32x128xf32>
    %49 = arith.truncf %47 : vector<32x512xf32> to vector<32x512xbf16>
    %50 = vector.extract_strided_slice %49 {offsets = [0, 128], sizes = [32, 128], strides = [1, 1]} : vector<32x512xbf16> to vector<32x128xbf16>
    %51 = vector.extract_strided_slice %49 {offsets = [0, 256], sizes = [32, 128], strides = [1, 1]} : vector<32x512xbf16> to vector<32x128xbf16>
    %52 = vector.extract_strided_slice %49 {offsets = [0, 384], sizes = [32, 128], strides = [1, 1]} : vector<32x512xbf16> to vector<32x128xbf16>
    %cst_10 = arith.constant dense<0.000000e+00> : vector<32x32xf32>
    %53 = tpu.matmul %50, %51, %cst_10 {dimension_numbers = #tpu.dot_dimension_numbers<[1], [1], [0], [0], [0, 0, 1, 0], [], []>} : vector<32x128xbf16>, vector<32x128xbf16>, vector<32x32xf32> -> vector<32x32xf32>
    %cst_11 = arith.constant 0.0883883461 : f32
    %54 = vector.broadcast %cst_11 : f32 to vector<32x32xf32>
    %55 = arith.mulf %53, %54 : vector<32x32xf32>
    %56 = tpu.iota {dimensions = array<i32: 0>} : vector<32x32xi32>
    %c4_i32_12 = arith.constant 4 : i32
    %57 = vector.broadcast %c4_i32_12 : i32 to vector<32x32xi32>
    %58 = arith.shrsi %56, %57 : vector<32x32xi32>
    %59 = tpu.iota {dimensions = array<i32: 1>} : vector<32x32xi32>
    %c4_i32_13 = arith.constant 4 : i32
    %60 = vector.broadcast %c4_i32_13 : i32 to vector<32x32xi32>
    %61 = arith.shrsi %59, %60 : vector<32x32xi32>
    %62 = arith.cmpi eq, %58, %61 : vector<32x32xi32>
    %cst_14 = arith.constant -1.000000e+30 : f32
    %63 = vector.broadcast %cst_14 : f32 to vector<32x32xf32>
    %64 = arith.select %62, %55, %63 : vector<32x32xi1>, vector<32x32xf32>
    %cst_15 = arith.constant dense<0xFF800000> : vector<32xf32>
    %65 = vector.multi_reduction <maximumf>, %64, %cst_15 [1] : vector<32x32xf32> to vector<32xf32>
    %66 = vector.shape_cast %65 : vector<32xf32> to vector<32x1xf32>
    %67 = vector.broadcast %66 : vector<32x1xf32> to vector<32x32xf32>
    %68 = arith.subf %64, %67 : vector<32x32xf32>
    %69 = math.exp %68 : vector<32x32xf32>
    %cst_16 = arith.constant dense<0.000000e+00> : vector<32xf32>
    %70 = vector.multi_reduction <add>, %69, %cst_16 [1] : vector<32x32xf32> to vector<32xf32>
    %71 = vector.shape_cast %70 : vector<32xf32> to vector<32x1xf32>
    %72 = tpu.reciprocal %71 {approx = true} : vector<32x1xf32> -> vector<32x1xf32>
    %73 = vector.broadcast %72 : vector<32x1xf32> to vector<32x32xf32>
    %74 = arith.mulf %69, %73 : vector<32x32xf32>
    %75 = arith.truncf %74 : vector<32x32xf32> to vector<32x32xbf16>
    %cst_17 = arith.constant dense<0.000000e+00> : vector<32x128xf32>
    %76 = tpu.matmul %75, %52, %cst_17 {dimension_numbers = #tpu.dot_dimension_numbers<[1], [0], [0], [1], [0, 0, 1, 1], [], []>} : vector<32x32xbf16>, vector<32x128xbf16>, vector<32x128xf32> -> vector<32x128xf32>
    %77 = arith.truncf %76 : vector<32x128xf32> to vector<32x128xbf16>
    %c0_18 = arith.constant 0 : index
    %c0_19 = arith.constant 0 : index
    %78 = vector.load %arg2[%c0_18, %c0_19] : memref<128x128xbf16, #tpu.memory_space<vmem>>, vector<128x128xbf16>
    %cst_20 = arith.constant dense<0.000000e+00> : vector<32x128xf32>
    %79 = tpu.matmul %77, %78, %cst_20 {dimension_numbers = #tpu.dot_dimension_numbers<[1], [0], [0], [1], [0, 0, 1, 1], [], []>} : vector<32x128xbf16>, vector<128x128xbf16>, vector<32x128xf32> -> vector<32x128xf32>
    %80 = arith.addf %48, %79 : vector<32x128xf32>
    %81 = arith.truncf %80 : vector<32x128xf32> to vector<32x128xbf16>
    %c0_21 = arith.constant 0 : index
    %c0_22 = arith.constant 0 : index
    %82 = vector.load %arg3[%c0_21, %c0_22] : memref<128x256xbf16, #tpu.memory_space<vmem>>, vector<128x256xbf16>
    %cst_23 = arith.constant dense<0.000000e+00> : vector<32x256xf32>
    %83 = tpu.matmul %81, %82, %cst_23 {dimension_numbers = #tpu.dot_dimension_numbers<[1], [0], [0], [1], [0, 0, 1, 1], [], []>} : vector<32x128xbf16>, vector<128x256xbf16>, vector<32x256xf32> -> vector<32x256xf32>
    %cst_24 = arith.constant 0.000000e+00 : f32
    %84 = vector.broadcast %cst_24 : f32 to vector<32x256xf32>
    %85 = arith.maximumf %83, %84 : vector<32x256xf32>
    %86 = arith.truncf %85 : vector<32x256xf32> to vector<32x256xbf16>
    %c0_25 = arith.constant 0 : index
    %c0_26 = arith.constant 0 : index
    %87 = vector.load %arg4[%c0_25, %c0_26] : memref<256x128xbf16, #tpu.memory_space<vmem>>, vector<256x128xbf16>
    %cst_27 = arith.constant dense<0.000000e+00> : vector<32x128xf32>
    %88 = tpu.matmul %86, %87, %cst_27 {dimension_numbers = #tpu.dot_dimension_numbers<[1], [0], [0], [1], [0, 0, 1, 1], [], []>} : vector<32x256xbf16>, vector<256x128xbf16>, vector<32x128xf32> -> vector<32x128xf32>
    %89 = arith.addf %80, %88 : vector<32x128xf32>
    %90 = arith.truncf %89 : vector<32x128xf32> to vector<32x128xbf16>
    %c0_28 = arith.constant 0 : index
    %c0_29 = arith.constant 0 : index
    %91 = vector.load %arg6[%c0_28, %c0_29] : memref<128x256xbf16, #tpu.memory_space<vmem>>, vector<128x256xbf16>
    %cst_30 = arith.constant dense<0.000000e+00> : vector<32x256xf32>
    %92 = tpu.matmul %90, %91, %cst_30 {dimension_numbers = #tpu.dot_dimension_numbers<[1], [0], [0], [1], [0, 0, 1, 1], [], []>} : vector<32x128xbf16>, vector<128x256xbf16>, vector<32x256xf32> -> vector<32x256xf32>
    %93 = arith.truncf %92 : vector<32x256xf32> to vector<32x256xbf16>
    %94 = vector.extract_strided_slice %93 {offsets = [0, 0], sizes = [32, 128], strides = [1, 1]} : vector<32x256xbf16> to vector<32x128xbf16>
    %95 = vector.extract_strided_slice %93 {offsets = [0, 128], sizes = [32, 128], strides = [1, 1]} : vector<32x256xbf16> to vector<32x128xbf16>
    %c0_31 = arith.constant 0 : index
    %c0_32 = arith.constant 0 : index
    %96 = vector.load %arg5[%c0_31, %c0_32] : memref<16x128xbf16, #tpu.memory_space<vmem>>, vector<16x128xbf16>
    %cst_33 = arith.constant dense<0.000000e+00> : vector<16x32xf32>
    %97 = tpu.matmul %96, %94, %cst_33 {dimension_numbers = #tpu.dot_dimension_numbers<[1], [1], [0], [0], [0, 0, 1, 0], [], []>} : vector<16x128xbf16>, vector<32x128xbf16>, vector<16x32xf32> -> vector<16x32xf32>
    %cst_34 = arith.constant 0.0883883461 : f32
    %98 = vector.broadcast %cst_34 : f32 to vector<16x32xf32>
    %99 = arith.mulf %97, %98 : vector<16x32xf32>
    %100 = tpu.iota {dimensions = array<i32: 0>} : vector<16x32xi32>
    %c3_i32 = arith.constant 3 : i32
    %101 = vector.broadcast %c3_i32 : i32 to vector<16x32xi32>
    %102 = arith.shrsi %100, %101 : vector<16x32xi32>
    %103 = tpu.iota {dimensions = array<i32: 1>} : vector<16x32xi32>
    %c4_i32_35 = arith.constant 4 : i32
    %104 = vector.broadcast %c4_i32_35 : i32 to vector<16x32xi32>
    %105 = arith.shrsi %103, %104 : vector<16x32xi32>
    %106 = arith.cmpi eq, %102, %105 : vector<16x32xi32>
    %cst_36 = arith.constant -1.000000e+30 : f32
    %107 = vector.broadcast %cst_36 : f32 to vector<16x32xf32>
    %108 = arith.select %106, %99, %107 : vector<16x32xi1>, vector<16x32xf32>
    %cst_37 = arith.constant dense<0xFF800000> : vector<16xf32>
    %109 = vector.multi_reduction <maximumf>, %108, %cst_37 [1] : vector<16x32xf32> to vector<16xf32>
    %110 = vector.shape_cast %109 : vector<16xf32> to vector<16x1xf32>
    %111 = vector.broadcast %110 : vector<16x1xf32> to vector<16x32xf32>
    %112 = arith.subf %108, %111 : vector<16x32xf32>
    %113 = math.exp %112 : vector<16x32xf32>
    %cst_38 = arith.constant dense<0.000000e+00> : vector<16xf32>
    %114 = vector.multi_reduction <add>, %113, %cst_38 [1] : vector<16x32xf32> to vector<16xf32>
    %115 = vector.shape_cast %114 : vector<16xf32> to vector<16x1xf32>
    %116 = tpu.reciprocal %115 {approx = true} : vector<16x1xf32> -> vector<16x1xf32>
    %117 = vector.broadcast %116 : vector<16x1xf32> to vector<16x32xf32>
    %118 = arith.mulf %113, %117 : vector<16x32xf32>
    %119 = arith.truncf %118 : vector<16x32xf32> to vector<16x32xbf16>
    %cst_39 = arith.constant dense<0.000000e+00> : vector<16x128xf32>
    %120 = tpu.matmul %119, %95, %cst_39 {dimension_numbers = #tpu.dot_dimension_numbers<[1], [0], [0], [1], [0, 0, 1, 1], [], []>} : vector<16x32xbf16>, vector<32x128xbf16>, vector<16x128xf32> -> vector<16x128xf32>
    %121 = arith.truncf %120 : vector<16x128xf32> to vector<16x128xbf16>
    %c0_40 = arith.constant 0 : index
    %c0_41 = arith.constant 0 : index
    %122 = vector.load %arg7[%c0_40, %c0_41] : memref<128x256xbf16, #tpu.memory_space<vmem>>, vector<128x256xbf16>
    %cst_42 = arith.constant dense<0.000000e+00> : vector<16x256xf32>
    %123 = tpu.matmul %121, %122, %cst_42 {dimension_numbers = #tpu.dot_dimension_numbers<[1], [0], [0], [1], [0, 0, 1, 1], [], []>} : vector<16x128xbf16>, vector<128x256xbf16>, vector<16x256xf32> -> vector<16x256xf32>
    %cst_43 = arith.constant dense<0xFF800000> : vector<16xf32>
    %124 = vector.multi_reduction <maximumf>, %123, %cst_43 [1] : vector<16x256xf32> to vector<16xf32>
    %125 = vector.shape_cast %124 : vector<16xf32> to vector<16x1xf32>
    %126 = tpu.iota {dimensions = array<i32: 1>} : vector<16x256xi32>
    %127 = arith.sitofp %126 : vector<16x256xi32> to vector<16x256xf32>
    %128 = vector.broadcast %125 : vector<16x1xf32> to vector<16x256xf32>
    %129 = arith.cmpf oge, %123, %128 : vector<16x256xf32>
    %cst_44 = arith.constant 2.560000e+02 : f32
    %130 = vector.broadcast %cst_44 : f32 to vector<16x256xf32>
    %131 = arith.select %129, %127, %130 : vector<16x256xi1>, vector<16x256xf32>
    %cst_45 = arith.constant dense<0x7F800000> : vector<16xf32>
    %132 = vector.multi_reduction <minimumf>, %131, %cst_45 [1] : vector<16x256xf32> to vector<16xf32>
    %133 = vector.shape_cast %132 : vector<16xf32> to vector<16x1xf32>
    %cst_46 = arith.constant 5.000000e-01 : f32
    %134 = vector.broadcast %cst_46 : f32 to vector<16x1xf32>
    %135 = arith.addf %133, %134 : vector<16x1xf32>
    %cst_47 = arith.constant 0.1171875 : f32
    %136 = vector.broadcast %cst_47 : f32 to vector<16x1xf32>
    %137 = arith.mulf %135, %136 : vector<16x1xf32>
    %cst_48 = arith.constant -1.500000e+01 : f32
    %138 = vector.broadcast %cst_48 : f32 to vector<16x1xf32>
    %139 = arith.addf %138, %137 : vector<16x1xf32>
    %140 = tpu.iota {dimensions = array<i32: 0>} : vector<16x8xi32>
    %c7_i32 = arith.constant 7 : i32
    %141 = vector.broadcast %c7_i32 : i32 to vector<16x8xi32>
    %142 = arith.andi %140, %141 : vector<16x8xi32>
    %143 = tpu.iota {dimensions = array<i32: 1>} : vector<16x8xi32>
    %144 = arith.cmpi eq, %142, %143 : vector<16x8xi32>
    %145 = arith.extui %144 : vector<16x8xi1> to vector<16x8xi32>
    %146 = arith.sitofp %145 : vector<16x8xi32> to vector<16x8xf32>
    %147 = tpu.iota {dimensions = array<i32: 1>} : vector<2x16xi32>
    %c3_i32_49 = arith.constant 3 : i32
    %148 = vector.broadcast %c3_i32_49 : i32 to vector<2x16xi32>
    %149 = arith.shrsi %147, %148 : vector<2x16xi32>
    %150 = tpu.iota {dimensions = array<i32: 0>} : vector<2x16xi32>
    %151 = arith.cmpi eq, %149, %150 : vector<2x16xi32>
    %152 = arith.extui %151 : vector<2x16xi1> to vector<2x16xi32>
    %153 = arith.sitofp %152 : vector<2x16xi32> to vector<2x16xf32>
    %154 = vector.broadcast %139 : vector<16x1xf32> to vector<16x8xf32>
    %155 = arith.mulf %154, %146 : vector<16x8xf32>
    %cst_50 = arith.constant dense<0.000000e+00> : vector<2x8xf32>
    %156 = tpu.matmul %153, %155, %cst_50 {dimension_numbers = #tpu.dot_dimension_numbers<[1], [0], [0], [1], [0, 0, 1, 1], [], []>} : vector<2x16xf32>, vector<16x8xf32>, vector<2x8xf32> -> vector<2x8xf32>
    %157 = vector.broadcast %7 : vector<2x1xf32> to vector<2x8xf32>
    %158 = arith.mulf %156, %157 : vector<2x8xf32>
    %c0_51 = arith.constant 0 : index
    %c0_52 = arith.constant 0 : index
    %159 = vector.load %arg8[%c0_51, %c0_52] : memref<2x8xf32, #tpu.memory_space<vmem>>, vector<2x8xf32>
    tpu.vector_store %arg8[%c0_51, %c0_52], %158 {strides = array<i32>} : memref<2x8xf32, #tpu.memory_space<vmem>>, vector<2x8xf32>,
    return
  }
}

</mosaic_0001>

<llo_original>
// kernel: chronos_predict.1
$region0: #{chronos_predict.1}
  #allocation0 [shape = 'u32[]', space=smem, size = 0x4, offset = 0x4, fixed_abs, tag = 'smem constant byte address 0x4 - core index']
  #allocation1 [shape = 'u32[144,128]{1,0:T(1,128)}', space=vmem, size = 0x12000, scoped, tag = 'internal scratch']
  %s0 = inlined_call_operand.hbm [shape: f32[2,16], index: 0, kind: input, shape index: {}]
  %s1 = inlined_call_operand.hbm [shape: bf16[256,512], index: 1, kind: input, shape index: {}]
  %s2 = inlined_call_operand.hbm [shape: bf16[128,128], index: 2, kind: input, shape index: {}]
  %s3 = inlined_call_operand.hbm [shape: bf16[128,256], index: 3, kind: input, shape index: {}]
  %s4 = inlined_call_operand.hbm [shape: bf16[256,128], index: 4, kind: input, shape index: {}]
  %s5 = inlined_call_operand.vmem [shape: bf16[16,128], index: 5, kind: input, shape index: {}]
  %s6 = inlined_call_operand.hbm [shape: bf16[128,256], index: 6, kind: input, shape index: {}]
  %s7 = inlined_call_operand.hbm [shape: bf16[128,256], index: 7, kind: input, shape index: {}]
  %s8 = inlined_call_operand.hbm [shape: f32[2,8], index: 8, kind: output, shape index: {}]
  %s9 = sld [smem:[#allocation0]]
  $region70: #{chronos_predict.1} parent=0
    _
  %s11 = ssub.s32 1, %s9
  %s12 = scalar_select 0, %s11, %s9
  $region1: #{chronos_predict.1} parent=0
    #allocation2 [shape = 'u8[1024]{0}', space=vmem, size = 0x400, scoped, tag = 'input window, operand 0, single buffered']
    #allocation3 [shape = 's32[1]{0}', space=sflag, size = 0x4, scoped, tag = 'scoped memory for chronos_predict.1']
    #allocation4 [shape = 's32[1]{0}', space=sflag, size = 0x4, scoped, tag = 'scoped memory for chronos_predict.1']
    #allocation5 [shape = 'u8[262144]{0}', space=vmem, size = 0x40000, scoped, tag = 'input window, operand 1, single buffered']
    #allocation6 [shape = 's32[1]{0}', space=sflag, size = 0x4, scoped, tag = 'scoped memory for chronos_predict.1']
    #allocation7 [shape = 'u8[32768]{0}', space=vmem, size = 0x8000, scoped, tag = 'input window, operand 2, single buffered']
    #allocation8 [shape = 'u8[65536]{0}', space=vmem, size = 0x10000, scoped, tag = 'input window, operand 3, single buffered']
    #allocation9 [shape = 's32[1]{0}', space=sflag, size = 0x4, scoped, tag = 'scoped memory for chronos_predict.1']
    #allocation10 [shape = 'u8[65536]{0}', space=vmem, size = 0x10000, scoped, tag = 'input window, operand 4, single buffered']
    #allocation11 [shape = 'u8[65536]{0}', space=vmem, size = 0x10000, scoped, tag = 'input window, operand 6, single buffered']
    #allocation12 [shape = 's32[1]{0}', space=sflag, size = 0x4, scoped, tag = 'scoped memory for chronos_predict.1']
    #allocation13 [shape = 'u8[65536]{0}', space=vmem, size = 0x10000, scoped, tag = 'input window, operand 7, single buffered']
    #allocation14 [shape = 'u8[1024]{0}', space=vmem, size = 0x400, scoped, tag = 'output window, operand 0, single buffered']
    %13 = vsyncpa [#allocation3], 0
    %14 = vsyncpa [#allocation6], 0
    %15 = vsyncpa [#allocation9], 0
    %16 = vsyncpa [#allocation12], 0
    %17 = vsyncpa [#allocation4], 0
    // Predicated region
    $region2: #{chronos_predict.1} parent=1 // pred_check
      _
    $region3: #{chronos_predict.1} parent=1 // pred_check_branch
      %19 = sbr.rel (0) target = $region5
    $region4: #{chronos_predict.1} parent=1 // pred_region
      %s21 = ssub.s32 32, 32
      %22 = vsyncadd [#allocation3], %s21
      %s24 = sshll.u32 [#allocation2], 4
      %s25 = int_to_ptr.vmem [resolvable:$true] %s24
      %27 = dma.hbm_to_vmem [thread:$0]  %s0, 32, %s25, [#allocation3]
    $region5: #{chronos_predict.1} parent=1 // pred_fallthru
      _
    // Predicated region
    $region6: #{chronos_predict.1} parent=1 // pred_check
      _
    $region7: #{chronos_predict.1} parent=1 // pred_check_branch
      %29 = sbr.rel (0) target = $region9
    $region8: #{chronos_predict.1} parent=1 // pred_region
      %s31 = ssub.s32 8192, 8192
      %32 = vsyncadd [#allocation6], %s31
      %s33 = sshll.u32 [#allocation5], 4
      %s34 = int_to_ptr.vmem [resolvable:$true] %s33
      %39 = dma.hbm_to_vmem [thread:$0]  %s1, 8192, %s34, [#allocation6], 256, 256, 16
    $region9: #{chronos_predict.1} parent=1 // pred_fallthru
      _
    // Predicated region
    $region10: #{chronos_predict.1} parent=1 // pred_check
      _
    $region11: #{chronos_predict.1} parent=1 // pred_check_branch
      %41 = sbr.rel (0) target = $region13
    $region12: #{chronos_predict.1} parent=1 // pred_region
      %s43 = ssub.s32 1024, 1024
      %44 = vsyncadd [#allocation6], %s43
      %s45 = sshll.u32 [#allocation7], 4
      %s46 = int_to_ptr.vmem [resolvable:$true] %s45
      %51 = dma.hbm_to_vmem [thread:$0]  %s2, 1024, %s46, [#allocation6], 64, 64, 4
    $region13: #{chronos_predict.1} parent=1 // pred_fallthru
      _
    // Predicated region
    $region14: #{chronos_predict.1} parent=1 // pred_check
      _
    $region15: #{chronos_predict.1} parent=1 // pred_check_branch
      %53 = sbr.rel (0) target = $region17
    $region16: #{chronos_predict.1} parent=1 // pred_region
      %s55 = ssub.s32 2048, 2048
      %56 = vsyncadd [#allocation9], %s55
      %s57 = sshll.u32 [#allocation8], 4
      %s58 = int_to_ptr.vmem [resolvable:$true] %s57
      %63 = dma.hbm_to_vmem [thread:$0]  %s3, 2048, %s58, [#allocation9], 128, 128, 8
    $region17: #{chronos_predict.1} parent=1 // pred_fallthru
      _
    // Predicated region
    $region18: #{chronos_predict.1} parent=1 // pred_check
      _
    $region19: #{chronos_predict.1} parent=1 // pred_check_branch
      %65 = sbr.rel (0) target = $region21
    $region20: #{chronos_predict.1} parent=1 // pred_region
      %s67 = ssub.s32 2048, 2048
      %68 = vsyncadd [#allocation9], %s67
      %s69 = sshll.u32 [#allocation10], 4
      %s70 = int_to_ptr.vmem [resolvable:$true] %s69
      %75 = dma.hbm_to_vmem [thread:$0]  %s4, 2048, %s70, [#allocation9], 64, 64, 4
    $region21: #{chronos_predict.1} parent=1 // pred_fallthru
      _
    // Predicated region
    $region22: #{chronos_predict.1} parent=1 // pred_check
      _
    $region23: #{chronos_predict.1} parent=1 // pred_check_branch
      %77 = sbr.rel (0) target = $region25
    $region24: #{chronos_predict.1} parent=1 // pred_region
      _
    $region25: #{chronos_predict.1} parent=1 // pred_fallthru
      _
    // Predicated region
    $region26: #{chronos_predict.1} parent=1 // pred_check
      _
    $region27: #{chronos_predict.1} parent=1 // pred_check_branch
      %79 = sbr.rel (0) target = $region29
    $region28: #{chronos_predict.1} parent=1 // pred_region
      %s81 = ssub.s32 2048, 2048
      %82 = vsyncadd [#allocation12], %s81
      %s83 = sshll.u32 [#allocation11], 4
      %s84 = int_to_ptr.vmem [resolvable:$true] %s83
      %89 = dma.hbm_to_vmem [thread:$0]  %s6, 2048, %s84, [#allocation12], 128, 128, 8
    $region29: #{chronos_predict.1} parent=1 // pred_fallthru
      _
    // Predicated region
    $region30: #{chronos_predict.1} parent=1 // pred_check
      _
    $region31: #{chronos_predict.1} parent=1 // pred_check_branch
      %91 = sbr.rel (0) target = $region33
    $region32: #{chronos_predict.1} parent=1 // pred_region
      %s93 = ssub.s32 2048, 2048
      %94 = vsyncadd [#allocation12], %s93
      %s95 = sshll.u32 [#allocation13], 4
      %s96 = int_to_ptr.vmem [resolvable:$true] %s95
      %101 = dma.hbm_to_vmem [thread:$0]  %s7, 2048, %s96, [#allocation12], 128, 128, 8
    $region33: #{chronos_predict.1} parent=1 // pred_fallthru
      _
    // Predicated region
    $region34: #{chronos_predict.1} parent=1 // pred_check
      _
    $region35: #{chronos_predict.1} parent=1 // pred_check_branch
      %103 = sbr.rel (0) target = $region37
    $region36: #{chronos_predict.1} parent=1 // pred_region
      %104 = dma.done [#allocation3], 32
    $region37: #{chronos_predict.1} parent=1 // pred_fallthru
      _
    // Predicated region
    $region38: #{chronos_predict.1} parent=1 // pred_check
      _
    $region39: #{chronos_predict.1} parent=1 // pred_check_branch
      %106 = sbr.rel (0) target = $region41
    $region40: #{chronos_predict.1} parent=1 // pred_region
      %107 = dma.done [#allocation6], 8192
    $region41: #{chronos_predict.1} parent=1 // pred_fallthru
      _
    // Predicated region
    $region42: #{chronos_predict.1} parent=1 // pred_check
      _
    $region43: #{chronos_predict.1} parent=1 // pred_check_branch
      %109 = sbr.rel (0) target = $region45
    $region44: #{chronos_predict.1} parent=1 // pred_region
      %110 = dma.done [#allocation6], 1024
    $region45: #{chronos_predict.1} parent=1 // pred_fallthru
      _
    // Predicated region
    $region46: #{chronos_predict.1} parent=1 // pred_check
      _
    $region47: #{chronos_predict.1} parent=1 // pred_check_branch
      %112 = sbr.rel (0) target = $region49
    $region48: #{chronos_predict.1} parent=1 // pred_region
      %113 = dma.done [#allocation9], 2048
    $region49: #{chronos_predict.1} parent=1 // pred_fallthru
      _
    // Predicated region
    $region50: #{chronos_predict.1} parent=1 // pred_check
      _
    $region51: #{chronos_predict.1} parent=1 // pred_check_branch
      %115 = sbr.rel (0) target = $region53
    $region52: #{chronos_predict.1} parent=1 // pred_region
      %116 = dma.done [#allocation9], 2048
    $region53: #{chronos_predict.1} parent=1 // pred_fallthru
      _
    // Predicated region
    $region54: #{chronos_predict.1} parent=1 // pred_check
      _
    $region55: #{chronos_predict.1} parent=1 // pred_check_branch
      %118 = sbr.rel (0) target = $region57
    $region56: #{chronos_predict.1} parent=1 // pred_region
      %119 = dma.done [#allocation12], 2048
    $region57: #{chronos_predict.1} parent=1 // pred_fallthru
      _
    // Predicated region
    $region58: #{chronos_predict.1} parent=1 // pred_check
      _
    $region59: #{chronos_predict.1} parent=1 // pred_check_branch
      %121 = sbr.rel (0) target = $region61
    $region60: #{chronos_predict.1} parent=1 // pred_region
      %122 = dma.done [#allocation12], 2048
    $region61: #{chronos_predict.1} parent=1 // pred_fallthru
      _
    %v124 = vld [vmem:[#allocation2] sm:$0x3]
    %v125 = vand.u32 2147483647, %v124
    %vm126 = vcmask 123904
    %v127 = vsel %vm126, %v125, 0.0
    %128 = vadd.xlane.f32.xlu0 %v127
    %v129 = vpop.xlane.xlu0 %128
    %v130 = vrcp.pop 16.0
    %v131 = vmul.f32 %v129, %v130
    %v132 = vadd.f32 %v131, 1e-06
    %v133 = vrcp.pop %v132
    %v134 = vmul.f32 %v124, %v133
    %v135 = vlaneseq
    %v136 = vshrl.u32 %v135, 7
    %v137 = vadd.s32 %v136, 8
    %v138 = vadd.s32 %v136, 16
    %v139 = vadd.s32 %v136, 24
    %v140 = vshra.s32 %v136, 4
    %v141 = vshra.s32 %v137, 4
    %v142 = vshra.s32 %v138, 4
    %v143 = vshra.s32 %v139, 4
    %v144 = vlaneseq
    %v145 = vand.u32 %v144, 127
    %vm146 = vcmp.eq.s32.totalorder %v140, %v145
    %vm147 = vcmp.eq.s32.totalorder %v141, %v145
    %vm148 = vcmp.eq.s32.totalorder %v142, %v145
    %vm149 = vcmp.eq.s32.totalorder %v143, %v145
    %v150 = vsel %vm146, 1, 0
    %v151 = vsel %vm147, 1, 0
    %v152 = vsel %vm148, 1, 0
    %v153 = vsel %vm149, 1, 0
    %v154 = vcvt.s32.f32 %v150
    %v155 = vcvt.s32.f32 %v151
    %v156 = vcvt.s32.f32 %v152
    %v157 = vcvt.s32.f32 %v153
    %v158 = vand.u32 %v136, 15
    %v159 = vand.u32 %v137, 15
    %v160 = vand.u32 %v138, 15
    %v161 = vand.u32 %v139, 15
    %vm162 = vcmp.eq.s32.totalorder %v158, %v145
    %vm163 = vcmp.eq.s32.totalorder %v159, %v145
    %vm164 = vcmp.eq.s32.totalorder %v160, %v145
    %vm165 = vcmp.eq.s32.totalorder %v161, %v145
    %v166 = vsel %vm162, 1, 0
    %v167 = vsel %vm163, 1, 0
    %v168 = vsel %vm164, 1, 0
    %v169 = vsel %vm165, 1, 0
    %v170 = vcvt.s32.f32 %v166
    %v171 = vcvt.s32.f32 %v167
    %v172 = vcvt.s32.f32 %v168
    %v173 = vcvt.s32.f32 %v169
    %vm174 = vcmask 15360
    %v176 = vsel %vm174, %v154, 0
    %v179 = vsel %vm174, %v155, 0
    %v182 = vsel %vm174, %v156, 0
    %v185 = vsel %vm174, %v157, 0
    %vm187 = vcmask 1041408
    %v189 = vsel %vm187, %v134, 0
    %191 = vmatprep.subr.mxu0 0.0
    %192 = vmatpush1.msra.mxu0 %v189
    %193 = vmatprep.subr.mxu0 0.0
    %194 = vmatpush1.msra.mxu0 0.0
    %195 = vmatprep.subr.mxu0 0.0
    %196 = vmatpush1.msra.mxu0 0.0
    %197 = vmatprep.subr.mxu0 0.0
    %198 = vmatpush1.msra.mxu0 0.0
    %199 = vmatprep.subr.mxu0 0.0
    %200 = vmatpush1.msra.mxu0 0.0
    %201 = vmatprep.subr.mxu0 0.0
    %202 = vmatpush1.msra.mxu0 0.0
    %203 = vmatprep.subr.mxu0 0.0
    %204 = vmatpush1.msra.mxu0 0.0
    %205 = vmatprep.subr.mxu0 0.0
    %206 = vmatpush1.msra.mxu0 0.0
    %207 = vmatprep.subr.mxu0 0.0
    %208 = vmatpush1.msra.mxu0 0.0
    %209 = vmatprep.subr.mxu0 0.0
    %210 = vmatpush1.msra.mxu0 0.0
    %211 = vmatprep.subr.mxu0 0.0
    %212 = vmatpush1.msra.mxu0 0.0
    %213 = vmatprep.subr.mxu0 0.0
    %214 = vmatpush1.msra.mxu0 0.0
    %215 = vmatprep.subr.mxu0 0.0
    %216 = vmatpush1.msra.mxu0 0.0
    %217 = vmatprep.subr.mxu0 0.0
    %218 = vmatpush1.msra.mxu0 0.0
    %219 = vmatprep.subr.mxu0 0.0
    %220 = vmatpush1.msra.mxu0 0.0
    %221 = vmatprep.subr.mxu0 0.0
    %222 = vmatpush1.msra.mxu0 0.0
    %223 = vmatprep.subr.mxu0 0.0
    %224 = vmatpush1.msra.mxu0 0.0
    %225 = vmatprep.subr.mxu0 0.0
    %226 = vmatpush1.msra.mxu0 0.0
    %227 = vmatprep.subr.mxu0 0.0
    %228 = vmatpush1.msra.mxu0 0.0
    %229 = vmatprep.subr.mxu0 0.0
    %230 = vmatpush1.msra.mxu0 0.0
    %231 = vmatprep.subr.mxu0 0.0
    %232 = vmatpush1.msra.mxu0 0.0
    %233 = vmatprep.subr.mxu0 0.0
    %234 = vmatpush1.msra.mxu0 0.0
    %235 = vmatprep.subr.mxu0 0.0
    %236 = vmatpush1.msra.mxu0 0.0
    %237 = vmatprep.subr.mxu0 0.0
    %238 = vmatpush1.msra.mxu0 0.0
    %239 = vmatprep.subr.mxu0 0.0
    %240 = vmatpush1.msra.mxu0 0.0
    %241 = vmatprep.subr.mxu0 0.0
    %242 = vmatpush1.msra.mxu0 0.0
    %243 = vmatprep.subr.mxu0 0.0
    %244 = vmatpush1.msra.mxu0 0.0
    %245 = vmatprep.subr.mxu0 0.0
    %246 = vmatpush1.msra.mxu0 0.0
    %247 = vmatprep.subr.mxu0 0.0
    %248 = vmatpush1.msra.mxu0 0.0
    %249 = vmatprep.subr.mxu0 0.0
    %250 = vmatpush1.msra.mxu0 0.0
    %251 = vmatprep.subr.mxu0 0.0
    %252 = vmatpush1.msra.mxu0 0.0
    %253 = vmatprep.subr.mxu0 0.0
    %254 = vmatpush1.msra.mxu0 0.0
    %255 = vmatprep.mubr.f32.mxu0 0.0
    %256 = vmatmul.mubr.f32.gmra.mrb[0].mxu0 %v176
    %v257 = vpop.f32.mrb[0].mxu0
    %v258 = vadd.f32 0.0, %v257
    %v259 = vpop.f32.mrb[0].mxu0
    %260 = vmatprep.mubr.f32.mxu0 0.0
    %261 = vmatmul.mubr.f32.gmra.mrb[0].mxu0 %v179
    %v262 = vpop.f32.mrb[0].mxu0
    %v263 = vadd.f32 0.0, %v262
    %v264 = vpop.f32.mrb[0].mxu0
    %265 = vmatprep.mubr.f32.mxu0 0.0
    %266 = vmatmul.mubr.f32.gmra.mrb[0].mxu0 %v182
    %v267 = vpop.f32.mrb[0].mxu0
    %v268 = vadd.f32 0.0, %v267
    %v269 = vpop.f32.mrb[0].mxu0
    %270 = vmatprep.mubr.f32.mxu0 0.0
    %271 = vmatmul.mubr.f32.gmra.mrb[0].mxu0 %v185
    %v272 = vpop.f32.mrb[0].mxu0
    %v273 = vadd.f32 0.0, %v272
    %v274 = vpop.f32.mrb[0].mxu0
    %275 = vdwg.mxu0
    %v276 = vmul.f32 %v258, %v170
    %v277 = vmul.f32 %v263, %v171
    %v278 = vmul.f32 %v268, %v172
    %v279 = vmul.f32 %v273, %v173
    %vm280 = vcmask 130048
    %v281 = vsel %vm280, %v276, 0.0
    %282 = vadd.xlane.f32.xlu0 %v281
    %v283 = vpop.xlane.xlu0 %282
    %v284 = vsel %vm280, %v277, 0.0
    %285 = vadd.xlane.f32.xlu0 %v284
    %v286 = vpop.xlane.xlu0 %285
    %v287 = vsel %vm280, %v278, 0.0
    %288 = vadd.xlane.f32.xlu0 %v287
    %v289 = vpop.xlane.xlu0 %288
    %v290 = vsel %vm280, %v279, 0.0
    %291 = vadd.xlane.f32.xlu0 %v290
    %v292 = vpop.xlane.xlu0 %291
    %v293 = vsub.f32 %v283, -15.0
    %v294 = vsub.f32 %v286, -15.0
    %v295 = vsub.f32 %v289, -15.0
    %v296 = vsub.f32 %v292, -15.0
    %v297 = vrcp.pop 0.1171875
    %v298 = vmul.f32 %v293, %v297
    %v299 = vmul.f32 %v294, %v297
    %v300 = vmul.f32 %v295, %v297
    %v301 = vmul.f32 %v296, %v297
    %v302 = vfloor.f32 %v298
    %v303 = vfloor.f32 %v299
    %v304 = vfloor.f32 %v300
    %v305 = vfloor.f32 %v301
    %v306 = vmax.f32 %v302, 0.0
    %v307 = vmax.f32 %v303, 0.0
    %v308 = vmax.f32 %v304, 0.0
    %v309 = vmax.f32 %v305, 0.0
    %v310 = vmin.f32 %v306, 255.0
    %v311 = vmin.f32 %v307, 255.0
    %v312 = vmin.f32 %v308, 255.0
    %v313 = vmin.f32 %v309, 255.0
    %v314 = vcvt.f32.s32.to.zero.pseudo %v310
    %v315 = vcvt.f32.s32.to.zero.pseudo %v311
    %v316 = vcvt.f32.s32.to.zero.pseudo %v312
    %v317 = vcvt.f32.s32.to.zero.pseudo %v313
    %v318 = vadd.s32 %v145, 128
    %vm319 = vcmp.eq.s32.totalorder %v145, %v314
    %vm320 = vcmp.eq.s32.totalorder %v318, %v314
    %vm321 = vcmp.eq.s32.totalorder %v145, %v315
    %vm322 = vcmp.eq.s32.totalorder %v318, %v315
    %vm323 = vcmp.eq.s32.totalorder %v145, %v316
    %vm324 = vcmp.eq.s32.totalorder %v318, %v316
    %vm325 = vcmp.eq.s32.totalorder %v145, %v317
    %vm326 = vcmp.eq.s32.totalorder %v318, %v317
    %v327 = vsel %vm319, 1, 0
    %v328 = vsel %vm320, 1, 0
    %v329 = vsel %vm321, 1, 0
    %v330 = vsel %vm322, 1, 0
    %v331 = vsel %vm323, 1, 0
    %v332 = vsel %vm324, 1, 0
    %v333 = vsel %vm325, 1, 0
    %v334 = vsel %vm326, 1, 0
    %v335 = vcvt.s32.f32 %v327
    %v336 = vcvt.s32.f32 %v328
    %v337 = vcvt.s32.f32 %v329
    %v338 = vcvt.s32.f32 %v330
    %v339 = vcvt.s32.f32 %v331
    %v340 = vcvt.s32.f32 %v332
    %v341 = vcvt.s32.f32 %v333
    %v342 = vcvt.s32.f32 %v334
    %v343 = vpack.c.bf16 %v337, %v335
    %v344 = vpack.c.bf16 %v338, %v336
    %v345 = vpack.c.bf16 %v341, %v339
    %v346 = vpack.c.bf16 %v342, %v340
    %v347 = vld [vmem:[#allocation5] sm:$0xff]
    %v348 = vld [vmem:[#allocation5 + $0x8] sm:$0xff]
    %v349 = vld [vmem:[#allocation5 + $0x10] sm:$0xff]
    %v350 = vld [vmem:[#allocation5 + $0x18] sm:$0xff]
    %v351 = vld [vmem:[#allocation5 + $0x20] sm:$0xff]
    %v352 = vld [vmem:[#allocation5 + $0x28] sm:$0xff]
    %v353 = vld [vmem:[#allocation5 + $0x30] sm:$0xff]
    %v354 = vld [vmem:[#allocation5 + $0x38] sm:$0xff]
    %v355 = vld [vmem:[#allocation5 + $0x40] sm:$0xff]
    %v356 = vld [vmem:[#allocation5 + $0x48] sm:$0xff]
    %v357 = vld [vmem:[#allocation5 + $0x50] sm:$0xff]
    %v358 = vld [vmem:[#allocation5 + $0x58] sm:$0xff]
    %v359 = vld [vmem:[#allocation5 + $0x60] sm:$0xff]
    %v360 = vld [vmem:[#allocation5 + $0x68] sm:$0xff]
    %v361 = vld [vmem:[#allocation5 + $0x70] sm:$0xff]
    %v362 = vld [vmem:[#allocation5 + $0x78] sm:$0xff]
    %v363 = vld [vmem:[#allocation5 + $0x80] sm:$0xff]
    %v364 = vld [vmem:[#allocation5 + $0x88] sm:$0xff]
    %v365 = vld [vmem:[#allocation5 + $0x90] sm:$0xff]
    %v366 = vld [vmem:[#allocation5 + $0x98] sm:$0xff]
    %v367 = vld [vmem:[#allocation5 + $0xa0] sm:$0xff]
    %v368 = vld [vmem:[#allocation5 + $0xa8] sm:$0xff]
    %v369 = vld [vmem:[#allocation5 + $0xb0] sm:$0xff]
    %v370 = vld [vmem:[#allocation5 + $0xb8] sm:$0xff]
    %v371 = vld [vmem:[#allocation5 + $0xc0] sm:$0xff]
    %v372 = vld [vmem:[#allocation5 + $0xc8] sm:$0xff]
    %v373 = vld [vmem:[#allocation5 + $0xd0] sm:$0xff]
    %v374 = vld [vmem:[#allocation5 + $0xd8] sm:$0xff]
    %v375 = vld [vmem:[#allocation5 + $0xe0] sm:$0xff]
    %v376 = vld [vmem:[#allocation5 + $0xe8] sm:$0xff]
    %v377 = vld [vmem:[#allocation5 + $0xf0] sm:$0xff]
    %v378 = vld [vmem:[#allocation5 + $0xf8] sm:$0xff]
    %v379 = vld [vmem:[#allocation5 + $0x100] sm:$0xff]
    %v380 = vld [vmem:[#allocation5 + $0x108] sm:$0xff]
    %v381 = vld [vmem:[#allocation5 + $0x110] sm:$0xff]
    %v382 = vld [vmem:[#allocation5 + $0x118] sm:$0xff]
    %v383 = vld [vmem:[#allocation5 + $0x120] sm:$0xff]
    %v384 = vld [vmem:[#allocation5 + $0x128] sm:$0xff]
    %v385 = vld [vmem:[#allocation5 + $0x130] sm:$0xff]
    %v386 = vld [vmem:[#allocation5 + $0x138] sm:$0xff]
    %v387 = vld [vmem:[#allocation5 + $0x140] sm:$0xff]
    %v388 = vld [vmem:[#allocation5 + $0x148] sm:$0xff]
    %v389 = vld [vmem:[#allocation5 + $0x150] sm:$0xff]
    %v390 = vld [vmem:[#allocation5 + $0x158] sm:$0xff]
    %v391 = vld [vmem:[#allocation5 + $0x160] sm:$0xff]
    %v392 = vld [vmem:[#allocation5 + $0x168] sm:$0xff]
    %v393 = vld [vmem:[#allocation5 + $0x170] sm:$0xff]
    %v394 = vld [vmem:[#allocation5 + $0x178] sm:$0xff]
    %v395 = vld [vmem:[#allocation5 + $0x180] sm:$0xff]
    %v396 = vld [vmem:[#allocation5 + $0x188] sm:$0xff]
    %v397 = vld [vmem:[#allocation5 + $0x190] sm:$0xff]
    %v398 = vld [vmem:[#allocation5 + $0x198] sm:$0xff]
    %v399 = vld [vmem:[#allocation5 + $0x1a0] sm:$0xff]
    %v400 = vld [vmem:[#allocation5 + $0x1a8] sm:$0xff]
    %v401 = vld [vmem:[#allocation5 + $0x1b0] sm:$0xff]
    %v402 = vld [vmem:[#allocation5 + $0x1b8] sm:$0xff]
    %v403 = vld [vmem:[#allocation5 + $0x1c0] sm:$0xff]
    %v404 = vld [vmem:[#allocation5 + $0x1c8] sm:$0xff]
    %v405 = vld [vmem:[#allocation5 + $0x1d0] sm:$0xff]
    %v406 = vld [vmem:[#allocation5 + $0x1d8] sm:$0xff]
    %v407 = vld [vmem:[#allocation5 + $0x1e0] sm:$0xff]
    %v408 = vld [vmem:[#allocation5 + $0x1e8] sm:$0xff]
    %v409 = vld [vmem:[#allocation5 + $0x1f0] sm:$0xff]
    %v410 = vld [vmem:[#allocation5 + $0x1f8] sm:$0xff]
    %v475 = vunpack.c.l.b16 %v347
    %v476 = vunpack.c.h.b16 %v347
    %v477 = vunpack.c.l.b16 %v348
    %v478 = vunpack.c.h.b16 %v348
    %v479 = vunpack.c.l.b16 %v349
    %v480 = vunpack.c.h.b16 %v349
    %v481 = vunpack.c.l.b16 %v350
    %v482 = vunpack.c.h.b16 %v350
    %v483 = vunpack.c.l.b16 %v351
    %v484 = vunpack.c.h.b16 %v351
    %v485 = vunpack.c.l.b16 %v352
    %v486 = vunpack.c.h.b16 %v352
    %v487 = vunpack.c.l.b16 %v353
    %v488 = vunpack.c.h.b16 %v353
    %v489 = vunpack.c.l.b16 %v354
    %v490 = vunpack.c.h.b16 %v354
    %v491 = vunpack.c.l.b16 %v355
    %v492 = vunpack.c.h.b16 %v355
    %v493 = vunpack.c.l.b16 %v356
    %v494 = vunpack.c.h.b16 %v356
    %v495 = vunpack.c.l.b16 %v357
    %v496 = vunpack.c.h.b16 %v357
    %v497 = vunpack.c.l.b16 %v358
    %v498 = vunpack.c.h.b16 %v358
    %v499 = vunpack.c.l.b16 %v359
    %v500 = vunpack.c.h.b16 %v359
    %v501 = vunpack.c.l.b16 %v360
    %v502 = vunpack.c.h.b16 %v360
    %v503 = vunpack.c.l.b16 %v361
    %v504 = vunpack.c.h.b16 %v361
    %v505 = vunpack.c.l.b16 %v362
    %v506 = vunpack.c.h.b16 %v362
    %v507 = vunpack.c.l.b16 %v363
    %v508 = vunpack.c.h.b16 %v363
    %v509 = vunpack.c.l.b16 %v364
    %v510 = vunpack.c.h.b16 %v364
    %v511 = vunpack.c.l.b16 %v365
    %v512 = vunpack.c.h.b16 %v365
    %v513 = vunpack.c.l.b16 %v366
    %v514 = vunpack.c.h.b16 %v366
    %v515 = vunpack.c.l.b16 %v367
    %v516 = vunpack.c.h.b16 %v367
    %v517 = vunpack.c.l.b16 %v368
    %v518 = vunpack.c.h.b16 %v368
    %v519 = vunpack.c.l.b16 %v369
    %v520 = vunpack.c.h.b16 %v369
    %v521 = vunpack.c.l.b16 %v370
    %v522 = vunpack.c.h.b16 %v370
    %v523 = vunpack.c.l.b16 %v371
    %v524 = vunpack.c.h.b16 %v371
    %v525 = vunpack.c.l.b16 %v372
    %v526 = vunpack.c.h.b16 %v372
    %v527 = vunpack.c.l.b16 %v373
    %v528 = vunpack.c.h.b16 %v373
    %v529 = vunpack.c.l.b16 %v374
    %v530 = vunpack.c.h.b16 %v374
    %v531 = vunpack.c.l.b16 %v375
    %v532 = vunpack.c.h.b16 %v375
    %v533 = vunpack.c.l.b16 %v376
    %v534 = vunpack.c.h.b16 %v376
    %v535 = vunpack.c.l.b16 %v377
    %v536 = vunpack.c.h.b16 %v377
    %v537 = vunpack.c.l.b16 %v378
    %v538 = vunpack.c.h.b16 %v378
    %v539 = vunpack.c.l.b16 %v379
    %v540 = vunpack.c.h.b16 %v379
    %v541 = vunpack.c.l.b16 %v380
    %v542 = vunpack.c.h.b16 %v380
    %v543 = vunpack.c.l.b16 %v381
    %v544 = vunpack.c.h.b16 %v381
    %v545 = vunpack.c.l.b16 %v382
    %v546 = vunpack.c.h.b16 %v382
    %v547 = vunpack.c.l.b16 %v383
    %v548 = vunpack.c.h.b16 %v383
    %v549 = vunpack.c.l.b16 %v384
    %v550 = vunpack.c.h.b16 %v384
    %v551 = vunpack.c.l.b16 %v385
    %v552 = vunpack.c.h.b16 %v385
    %v553 = vunpack.c.l.b16 %v386
    %v554 = vunpack.c.h.b16 %v386
    %v555 = vunpack.c.l.b16 %v387
    %v556 = vunpack.c.h.b16 %v387
    %v557 = vunpack.c.l.b16 %v388
    %v558 = vunpack.c.h.b16 %v388
    %v559 = vunpack.c.l.b16 %v389
    %v560 = vunpack.c.h.b16 %v389
    %v561 = vunpack.c.l.b16 %v390
    %v562 = vunpack.c.h.b16 %v390
    %v563 = vunpack.c.l.b16 %v391
    %v564 = vunpack.c.h.b16 %v391
    %v565 = vunpack.c.l.b16 %v392
    %v566 = vunpack.c.h.b16 %v392
    %v567 = vunpack.c.l.b16 %v393
    %v568 = vunpack.c.h.b16 %v393
    %v569 = vunpack.c.l.b16 %v394
    %v570 = vunpack.c.h.b16 %v394
    %v571 = vunpack.c.l.b16 %v395
    %v572 = vunpack.c.h.b16 %v395
    %v573 = vunpack.c.l.b16 %v396
    %v574 = vunpack.c.h.b16 %v396
    %v575 = vunpack.c.l.b16 %v397
    %v576 = vunpack.c.h.b16 %v397
    %v577 = vunpack.c.l.b16 %v398
    %v578 = vunpack.c.h.b16 %v398
    %v579 = vunpack.c.l.b16 %v399
    %v580 = vunpack.c.h.b16 %v399
    %v581 = vunpack.c.l.b16 %v400
    %v582 = vunpack.c.h.b16 %v400
    %v583 = vunpack.c.l.b16 %v401
    %v584 = vunpack.c.h.b16 %v401
    %v585 = vunpack.c.l.b16 %v402
    %v586 = vunpack.c.h.b16 %v402
    %v587 = vunpack.c.l.b16 %v403
    %v588 = vunpack.c.h.b16 %v403
    %v589 = vunpack.c.l.b16 %v404
    %v590 = vunpack.c.h.b16 %v404
    %v591 = vunpack.c.l.b16 %v405
    %v592 = vunpack.c.h.b16 %v405
    %v593 = vunpack.c.l.b16 %v406
    %v594 = vunpack.c.h.b16 %v406
    %v595 = vunpack.c.l.b16 %v407
    %v596 = vunpack.c.h.b16 %v407
    %v597 = vunpack.c.l.b16 %v408
    %v598 = vunpack.c.h.b16 %v408
    %v599 = vunpack.c.l.b16 %v409
    %v600 = vunpack.c.h.b16 %v409
    %v601 = vunpack.c.l.b16 %v410
    %v602 = vunpack.c.h.b16 %v410
    %v603 = vpack.c.b16 %v479, %v475
    %v604 = vpack.c.b16 %v480, %v476
    %v605 = vpack.c.b16 %v481, %v477
    %v606 = vpack.c.b16 %v482, %v478
    %v607 = vpack.c.b16 %v487, %v483
    %v608 = vpack.c.b16 %v488, %v484
    %v609 = vpack.c.b16 %v489, %v485
    %v610 = vpack.c.b16 %v490, %v486
    %v611 = vpack.c.b16 %v495, %v491
    %v612 = vpack.c.b16 %v496, %v492
    %v613 = vpack.c.b16 %v497, %v493
    %v614 = vpack.c.b16 %v498, %v494
    %v615 = vpack.c.b16 %v503, %v499
    %v616 = vpack.c.b16 %v504, %v500
    %v617 = vpack.c.b16 %v505, %v501
    %v618 = vpack.c.b16 %v506, %v502
    %v619 = vpack.c.b16 %v511, %v507
    %v620 = vpack.c.b16 %v512, %v508
    %v621 = vpack.c.b16 %v513, %v509
    %v622 = vpack.c.b16 %v514, %v510
    %v623 = vpack.c.b16 %v519, %v515
    %v624 = vpack.c.b16 %v520, %v516
    %v625 = vpack.c.b16 %v521, %v517
    %v626 = vpack.c.b16 %v522, %v518
    %v627 = vpack.c.b16 %v527, %v523
    %v628 = vpack.c.b16 %v528, %v524
    %v629 = vpack.c.b16 %v529, %v525
    %v630 = vpack.c.b16 %v530, %v526
    %v631 = vpack.c.b16 %v535, %v531
    %v632 = vpack.c.b16 %v536, %v532
    %v633 = vpack.c.b16 %v537, %v533
    %v634 = vpack.c.b16 %v538, %v534
    %v635 = vpack.c.b16 %v543, %v539
    %v636 = vpack.c.b16 %v544, %v540
    %v637 = vpack.c.b16 %v545, %v541
    %v638 = vpack.c.b16 %v546, %v542
    %v639 = vpack.c.b16 %v551, %v547
    %v640 = vpack.c.b16 %v552, %v548
    %v641 = vpack.c.b16 %v553, %v549
    %v642 = vpack.c.b16 %v554, %v550
    %v643 = vpack.c.b16 %v559, %v555
    %v644 = vpack.c.b16 %v560, %v556
    %v645 = vpack.c.b16 %v561, %v557
    %v646 = vpack.c.b16 %v562, %v558
    %v647 = vpack.c.b16 %v567, %v563
    %v648 = vpack.c.b16 %v568, %v564
    %v649 = vpack.c.b16 %v569, %v565
    %v650 = vpack.c.b16 %v570, %v566
    %v651 = vpack.c.b16 %v575, %v571
    %v652 = vpack.c.b16 %v576, %v572
    %v653 = vpack.c.b16 %v577, %v573
    %v654 = vpack.c.b16 %v578, %v574
    %v655 = vpack.c.b16 %v583, %v579
    %v656 = vpack.c.b16 %v584, %v580
    %v657 = vpack.c.b16 %v585, %v581
    %v658 = vpack.c.b16 %v586, %v582
    %v659 = vpack.c.b16 %v591, %v587
    %v660 = vpack.c.b16 %v592, %v588
    %v661 = vpack.c.b16 %v593, %v589
    %v662 = vpack.c.b16 %v594, %v590
    %v663 = vpack.c.b16 %v599, %v595
    %v664 = vpack.c.b16 %v600, %v596
    %v665 = vpack.c.b16 %v601, %v597
    %v666 = vpack.c.b16 %v602, %v598
    %731 = vmatprep.subr.bf16.mxu0 %v604
    %732 = vmatpush1.bf16.msra.mxu0 %v603
    %733 = vmatprep.subr.bf16.mxu0 %v608
    %734 = vmatpush1.bf16.msra.mxu0 %v607
    %735 = vmatprep.subr.bf16.mxu0 %v612
    %736 = vmatpush1.bf16.msra.mxu0 %v611
    %737 = vmatprep.subr.bf16.mxu0 %v616
    %738 = vmatpush1.bf16.msra.mxu0 %v615
    %739 = vmatprep.subr.bf16.mxu0 %v620
    %740 = vmatpush1.bf16.msra.mxu0 %v619
    %741 = vmatprep.subr.bf16.mxu0 %v624
    %742 = vmatpush1.bf16.msra.mxu0 %v623
    %743 = vmatprep.subr.bf16.mxu0 %v628
    %744 = vmatpush1.bf16.msra.mxu0 %v627
    %745 = vmatprep.subr.bf16.mxu0 %v632
    %746 = vmatpush1.bf16.msra.mxu0 %v631
    %747 = vmatprep.subr.bf16.mxu0 %v636
    %748 = vmatpush1.bf16.msra.mxu0 %v635
    %749 = vmatprep.subr.bf16.mxu0 %v640
    %750 = vmatpush1.bf16.msra.mxu0 %v639
    %751 = vmatprep.subr.bf16.mxu0 %v644
    %752 = vmatpush1.bf16.msra.mxu0 %v643
    %753 = vmatprep.subr.bf16.mxu0 %v648
    %754 = vmatpush1.bf16.msra.mxu0 %v647
    %755 = vmatprep.subr.bf16.mxu0 %v652
    %756 = vmatpush1.bf16.msra.mxu0 %v651
    %757 = vmatprep.subr.bf16.mxu0 %v656
    %758 = vmatpush1.bf16.msra.mxu0 %v655
    %759 = vmatprep.subr.bf16.mxu0 %v660
    %760 = vmatpush1.bf16.msra.mxu0 %v659
    %761 = vmatprep.subr.bf16.mxu0 %v664
    %762 = vmatpush1.bf16.msra.mxu0 %v663
    %763 = vmatprep.mubr.bf16.mxu0 %v344
    %764 = vmatmul.mubr.bf16.gmra.mrb[0].mxu0 %v343
    %v765 = vpop.f32.mrb[0].mxu0
    %v766 = vadd.f32 0.0, %v765
    %v767 = vpop.f32.mrb[0].mxu0
    %v768 = vadd.f32 0.0, %v767
    %v769 = vpop.f32.mrb[0].mxu0
    %v770 = vadd.f32 0.0, %v769
    %v771 = vpop.f32.mrb[0].mxu0
    %v772 = vadd.f32 0.0, %v771
    %773 = vmatprep.mubr.bf16.mxu0 %v346
    %774 = vmatmul.mubr.bf16.gmra.mrb[0].mxu0 %v345
    %v775 = vpop.f32.mrb[0].mxu0
    %v776 = vadd.f32 0.0, %v775
    %v777 = vpop.f32.mrb[0].mxu0
    %v778 = vadd.f32 0.0, %v777
    %v779 = vpop.f32.mrb[0].mxu0
    %v780 = vadd.f32 0.0, %v779
    %v781 = vpop.f32.mrb[0].mxu0
    %v782 = vadd.f32 0.0, %v781
    %783 = vdwg.mxu0
    %784 = vmatprep.subr.bf16.mxu0 %v606
    %785 = vmatpush1.bf16.msra.mxu0 %v605
    %786 = vmatprep.subr.bf16.mxu0 %v610
    %787 = vmatpush1.bf16.msra.mxu0 %v609
    %788 = vmatprep.subr.bf16.mxu0 %v614
    %789 = vmatpush1.bf16.msra.mxu0 %v613
    %790 = vmatprep.subr.bf16.mxu0 %v618
    %791 = vmatpush1.bf16.msra.mxu0 %v617
    %792 = vmatprep.subr.bf16.mxu0 %v622
    %793 = vmatpush1.bf16.msra.mxu0 %v621
    %794 = vmatprep.subr.bf16.mxu0 %v626
    %795 = vmatpush1.bf16.msra.mxu0 %v625
    %796 = vmatprep.subr.bf16.mxu0 %v630
    %797 = vmatpush1.bf16.msra.mxu0 %v629
    %798 = vmatprep.subr.bf16.mxu0 %v634
    %799 = vmatpush1.bf16.msra.mxu0 %v633
    %800 = vmatprep.subr.bf16.mxu0 %v638
    %801 = vmatpush1.bf16.msra.mxu0 %v637
    %802 = vmatprep.subr.bf16.mxu0 %v642
    %803 = vmatpush1.bf16.msra.mxu0 %v641
    %804 = vmatprep.subr.bf16.mxu0 %v646
    %805 = vmatpush1.bf16.msra.mxu0 %v645
    %806 = vmatprep.subr.bf16.mxu0 %v650
    %807 = vmatpush1.bf16.msra.mxu0 %v649
    %808 = vmatprep.subr.bf16.mxu0 %v654
    %809 = vmatpush1.bf16.msra.mxu0 %v653
    %810 = vmatprep.subr.bf16.mxu0 %v658
    %811 = vmatpush1.bf16.msra.mxu0 %v657
    %812 = vmatprep.subr.bf16.mxu0 %v662
    %813 = vmatpush1.bf16.msra.mxu0 %v661
    %814 = vmatprep.subr.bf16.mxu0 %v666
    %815 = vmatpush1.bf16.msra.mxu0 %v665
    %816 = vmatprep.mubr.bf16.mxu0 %v344
    %817 = vmatmul.mubr.bf16.gmra.mrb[0].mxu0 %v343
    %v818 = vpop.f32.mrb[0].mxu0
    %v819 = vadd.f32 0.0, %v818
    %v820 = vpop.f32.mrb[0].mxu0
    %v821 = vadd.f32 0.0, %v820
    %v822 = vpop.f32.mrb[0].mxu0
    %v823 = vadd.f32 0.0, %v822
    %v824 = vpop.f32.mrb[0].mxu0
    %v825 = vadd.f32 0.0, %v824
    %826 = vmatprep.mubr.bf16.mxu0 %v346
    %827 = vmatmul.mubr.bf16.gmra.mrb[0].mxu0 %v345
    %v828 = vpop.f32.mrb[0].mxu0
    %v829 = vadd.f32 0.0, %v828
    %v830 = vpop.f32.mrb[0].mxu0
    %v831 = vadd.f32 0.0, %v830
    %v832 = vpop.f32.mrb[0].mxu0
    %v833 = vadd.f32 0.0, %v832
    %v834 = vpop.f32.mrb[0].mxu0
    %v835 = vadd.f32 0.0, %v834
    %836 = vdwg.mxu0
    %v837 = vpack.c.bf16 %v772, %v768
    %v838 = vpack.c.bf16 %v823, %v819
    %v839 = vpack.c.bf16 %v825, %v821
    %v840 = vpack.c.bf16 %v782, %v778
    %v841 = vpack.c.bf16 %v833, %v829
    %v842 = vpack.c.bf16 %v835, %v831
    %843 = vmatprep.subr.bf16.mxu0 0
    %844 = vmatpush1.bf16.xpose.msra.mxu0 %v838
    %845 = vmatprep.subr.bf16.mxu0 0
    %846 = vmatpush1.bf16.xpose.msra.mxu0 %v841
    %847 = vmatprep.subr.bf16.mxu0 0
    %848 = vmatpush1.bf16.xpose.msra.mxu0 0
    %849 = vmatprep.subr.bf16.mxu0 0
    %850 = vmatpush1.bf16.xpose.msra.mxu0 0
    %851 = vmatprep.subr.bf16.mxu0 0
    %852 = vmatpush1.bf16.xpose.msra.mxu0 0
    %853 = vmatprep.subr.bf16.mxu0 0
    %854 = vmatpush1.bf16.xpose.msra.mxu0 0
    %855 = vmatprep.subr.bf16.mxu0 0
    %856 = vmatpush1.bf16.xpose.msra.mxu0 0
    %857 = vmatprep.subr.bf16.mxu0 0
    %858 = vmatpush1.bf16.xpose.msra.mxu0 0
    %859 = vmatprep.subr.bf16.mxu0 0
    %860 = vmatpush1.bf16.xpose.msra.mxu0 0
    %861 = vmatprep.subr.bf16.mxu0 0
    %862 = vmatpush1.bf16.xpose.msra.mxu0 0
    %863 = vmatprep.subr.bf16.mxu0 0
    %864 = vmatpush1.bf16.xpose.msra.mxu0 0
    %865 = vmatprep.subr.bf16.mxu0 0
    %866 = vmatpush1.bf16.xpose.msra.mxu0 0
    %867 = vmatprep.subr.bf16.mxu0 0
    %868 = vmatpush1.bf16.xpose.msra.mxu0 0
    %869 = vmatprep.subr.bf16.mxu0 0
    %870 = vmatpush1.bf16.xpose.msra.mxu0 0
    %871 = vmatprep.subr.bf16.mxu0 0
    %872 = vmatpush1.bf16.xpose.msra.mxu0 0
    %873 = vmatprep.subr.bf16.mxu0 0
    %874 = vmatpush1.bf16.xpose.msra.mxu0 0
    %875 = vmatprep.mubr.bf16.mxu0 0
    %876 = vmatmul.mubr.bf16.gmra.mrb[0].mxu0 %v837
    %v877 = vpop.f32.mrb[0].mxu0
    %v878 = vadd.f32 0.0, %v877
    %v879 = vpop.f32.mrb[0].mxu0
    %v880 = vpop.f32.mrb[0].mxu0
    %v881 = vadd.f32 0.0, %v880
    %v882 = vpop.f32.mrb[0].mxu0
    %883 = vmatprep.mubr.bf16.mxu0 0
    %884 = vmatmul.mubr.bf16.gmra.mrb[0].mxu0 %v840
    %v885 = vpop.f32.mrb[0].mxu0
    %v886 = vadd.f32 0.0, %v885
    %v887 = vpop.f32.mrb[0].mxu0
    %v888 = vpop.f32.mrb[0].mxu0
    %v889 = vadd.f32 0.0, %v888
    %v890 = vpop.f32.mrb[0].mxu0
    %891 = vdwg.mxu0
    %v892 = vmul.f32 %v878, 0.088388346
    %v893 = vmul.f32 %v881, 0.088388346
    %v894 = vmul.f32 %v886, 0.088388346
    %v895 = vmul.f32 %v889, 0.088388346
    %v896 = vshra.s32 %v145, 4
    %vm897 = vcmp.eq.s32.totalorder %v140, %v896
    %vm898 = vcmp.eq.s32.totalorder %v141, %v896
    %vm899 = vcmp.eq.s32.totalorder %v142, %v896
    %vm900 = vcmp.eq.s32.totalorder %v143, %v896
    %v901 = vsel %vm897, %v892, -1e+30
    %v902 = vsel %vm898, %v893, -1e+30
    %v903 = vsel %vm899, %v894, -1e+30
    %v904 = vsel %vm900, %v895, -1e+30
    %vm905 = vcmask 261120
    %v906 = vsel %vm905, %v901, -inf
    %907 = vmax.xlane.f32.xlu0 %v906
    %v908 = vpop.xlane.xlu0 %907
    %v909 = vsel %vm905, %v902, -inf
    %910 = vmax.xlane.f32.xlu0 %v909
    %v911 = vpop.xlane.xlu0 %910
    %v912 = vsel %vm905, %v903, -inf
    %913 = vmax.xlane.f32.xlu0 %v912
    %v914 = vpop.xlane.xlu0 %913
    %v915 = vsel %vm905, %v904, -inf
    %916 = vmax.xlane.f32.xlu0 %v915
    %v917 = vpop.xlane.xlu0 %916
    %v918 = vsub.f32 %v901, %v908
    %v919 = vsub.f32 %v902, %v911
    %v920 = vsub.f32 %v903, %v914
    %v921 = vsub.f32 %v904, %v917
    %v922 = vmul.f32 %v918, 1.442695
    %v923 = vpow.pop %v922
    %v924 = vmul.f32 %v919, 1.442695
    %v925 = vpow.pop %v924
    %v926 = vmul.f32 %v920, 1.442695
    %v927 = vpow.pop %v926
    %v928 = vmul.f32 %v921, 1.442695
    %v929 = vpow.pop %v928
    %v930 = vsel %vm905, %v923, 0.0
    %931 = vadd.xlane.f32.xlu0 %v930
    %v932 = vpop.xlane.xlu0 %931
    %v933 = vsel %vm905, %v925, 0.0
    %934 = vadd.xlane.f32.xlu0 %v933
    %v935 = vpop.xlane.xlu0 %934
    %v936 = vsel %vm905, %v927, 0.0
    %937 = vadd.xlane.f32.xlu0 %v936
    %v938 = vpop.xlane.xlu0 %937
    %v939 = vsel %vm905, %v929, 0.0
    %940 = vadd.xlane.f32.xlu0 %v939
    %v941 = vpop.xlane.xlu0 %940
    %v942 = vrcp.pop %v932
    %v943 = vrcp.pop %v935
    %v944 = vrcp.pop %v938
    %v945 = vrcp.pop %v941
    %v946 = vmul.f32 %v923, %v942
    %v947 = vmul.f32 %v925, %v943
    %v948 = vmul.f32 %v927, %v944
    %v949 = vmul.f32 %v929, %v945
    %v950 = vpack.c.bf16 %v947, %v946
    %v951 = vpack.c.bf16 %v949, %v948
    %v953 = vsel %vm905, %v950, 0
    %v956 = vsel %vm905, %v951, 0
    %958 = vmatprep.subr.bf16.mxu0 0
    %959 = vmatpush1.bf16.msra.mxu0 %v839
    %960 = vmatprep.subr.bf16.mxu0 0
    %961 = vmatpush1.bf16.msra.mxu0 %v842
    %962 = vmatprep.subr.bf16.mxu0 0
    %963 = vmatpush1.bf16.msra.mxu0 0
    %964 = vmatprep.subr.bf16.mxu0 0
    %965 = vmatpush1.bf16.msra.mxu0 0
    %966 = vmatprep.subr.bf16.mxu0 0
    %967 = vmatpush1.bf16.msra.mxu0 0
    %968 = vmatprep.subr.bf16.mxu0 0
    %969 = vmatpush1.bf16.msra.mxu0 0
    %970 = vmatprep.subr.bf16.mxu0 0
    %971 = vmatpush1.bf16.msra.mxu0 0
    %972 = vmatprep.subr.bf16.mxu0 0
    %973 = vmatpush1.bf16.msra.mxu0 0
    %974 = vmatprep.subr.bf16.mxu0 0
    %975 = vmatpush1.bf16.msra.mxu0 0
    %976 = vmatprep.subr.bf16.mxu0 0
    %977 = vmatpush1.bf16.msra.mxu0 0
    %978 = vmatprep.subr.bf16.mxu0 0
    %979 = vmatpush1.bf16.msra.mxu0 0
    %980 = vmatprep.subr.bf16.mxu0 0
    %981 = vmatpush1.bf16.msra.mxu0 0
    %982 = vmatprep.subr.bf16.mxu0 0
    %983 = vmatpush1.bf16.msra.mxu0 0
    %984 = vmatprep.subr.bf16.mxu0 0
    %985 = vmatpush1.bf16.msra.mxu0 0
    %986 = vmatprep.subr.bf16.mxu0 0
    %987 = vmatpush1.bf16.msra.mxu0 0
    %988 = vmatprep.subr.bf16.mxu0 0
    %989 = vmatpush1.bf16.msra.mxu0 0
    %990 = vmatprep.mubr.bf16.mxu0 0
    %991 = vmatmul.mubr.bf16.gmra.mrb[0].mxu0 %v953
    %v992 = vpop.f32.mrb[0].mxu0
    %v993 = vadd.f32 0.0, %v992
    %v994 = vpop.f32.mrb[0].mxu0
    %v995 = vpop.f32.mrb[0].mxu0
    %v996 = vadd.f32 0.0, %v995
    %v997 = vpop.f32.mrb[0].mxu0
    %998 = vmatprep.mubr.bf16.mxu0 0
    %999 = vmatmul.mubr.bf16.gmra.mrb[0].mxu0 %v956
    %v1000 = vpop.f32.mrb[0].mxu0
    %v1001 = vadd.f32 0.0, %v1000
    %v1002 = vpop.f32.mrb[0].mxu0
    %v1003 = vpop.f32.mrb[0].mxu0
    %v1004 = vadd.f32 0.0, %v1003
    %v1005 = vpop.f32.mrb[0].mxu0
    %1006 = vdwg.mxu0
    %v1007 = vpack.c.bf16 %v996, %v993
    %v1008 = vpack.c.bf16 %v1004, %v1001
    %v1009 = vld [vmem:[#allocation7] sm:$0xf]
    %v1010 = vld [vmem:[#allocation7 + $0x4] sm:$0xf]
    %v1011 = vld [vmem:[#allocation7 + $0x8] sm:$0xf]
    %v1012 = vld [vmem:[#allocation7 + $0xc] sm:$0xf]
    %v1013 = vld [vmem:[#allocation7 + $0x10] sm:$0xf]
    %v1014 = vld [vmem:[#allocation7 + $0x14] sm:$0xf]
    %v1015 = vld [vmem:[#allocation7 + $0x18] sm:$0xf]
    %v1016 = vld [vmem:[#allocation7 + $0x1c] sm:$0xf]
    %v1017 = vld [vmem:[#allocation7 + $0x20] sm:$0xf]
    %v1018 = vld [vmem:[#allocation7 + $0x24] sm:$0xf]
    %v1019 = vld [vmem:[#allocation7 + $0x28] sm:$0xf]
    %v1020 = vld [vmem:[#allocation7 + $0x2c] sm:$0xf]
    %v1021 = vld [vmem:[#allocation7 + $0x30] sm:$0xf]
    %v1022 = vld [vmem:[#allocation7 + $0x34] sm:$0xf]
    %v1023 = vld [vmem:[#allocation7 + $0x38] sm:$0xf]
    %v1024 = vld [vmem:[#allocation7 + $0x3c] sm:$0xf]
    %v1041 = vunpack.c.l.b16 %v1009
    %v1042 = vunpack.c.l.b16 %v1010
    %v1043 = vunpack.c.l.b16 %v1011
    %v1044 = vunpack.c.l.b16 %v1012
    %v1045 = vunpack.c.l.b16 %v1013
    %v1046 = vunpack.c.l.b16 %v1014
    %v1047 = vunpack.c.l.b16 %v1015
    %v1048 = vunpack.c.l.b16 %v1016
    %v1049 = vunpack.c.l.b16 %v1017
    %v1050 = vunpack.c.l.b16 %v1018
    %v1051 = vunpack.c.l.b16 %v1019
    %v1052 = vunpack.c.l.b16 %v1020
    %v1053 = vunpack.c.l.b16 %v1021
    %v1054 = vunpack.c.l.b16 %v1022
    %v1055 = vunpack.c.l.b16 %v1023
    %v1056 = vunpack.c.l.b16 %v1024
    %v1057 = vpack.c.b16 %v1042, %v1041
    %v1058 = vpack.c.b16 %v1044, %v1043
    %v1059 = vpack.c.b16 %v1046, %v1045
    %v1060 = vpack.c.b16 %v1048, %v1047
    %v1061 = vpack.c.b16 %v1050, %v1049
    %v1062 = vpack.c.b16 %v1052, %v1051
    %v1063 = vpack.c.b16 %v1054, %v1053
    %v1064 = vpack.c.b16 %v1056, %v1055
    %1073 = vmatprep.subr.bf16.mxu0 0
    %1074 = vmatpush1.bf16.msra.mxu0 %v1057
    %1075 = vmatprep.subr.bf16.mxu0 0
    %1076 = vmatpush1.bf16.msra.mxu0 %v1058
    %1077 = vmatprep.subr.bf16.mxu0 0
    %1078 = vmatpush1.bf16.msra.mxu0 %v1059
    %1079 = vmatprep.subr.bf16.mxu0 0
    %1080 = vmatpush1.bf16.msra.mxu0 %v1060
    %1081 = vmatprep.subr.bf16.mxu0 0
    %1082 = vmatpush1.bf16.msra.mxu0 %v1061
    %1083 = vmatprep.subr.bf16.mxu0 0
    %1084 = vmatpush1.bf16.msra.mxu0 %v1062
    %1085 = vmatprep.subr.bf16.mxu0 0
    %1086 = vmatpush1.bf16.msra.mxu0 %v1063
    %1087 = vmatprep.subr.bf16.mxu0 0
    %1088 = vmatpush1.bf16.msra.mxu0 %v1064
    %1089 = vmatprep.subr.bf16.mxu0 0
    %1090 = vmatpush1.bf16.msra.mxu0 0
    %1091 = vmatprep.subr.bf16.mxu0 0
    %1092 = vmatpush1.bf16.msra.mxu0 0
    %1093 = vmatprep.subr.bf16.mxu0 0
    %1094 = vmatpush1.bf16.msra.mxu0 0
    %1095 = vmatprep.subr.bf16.mxu0 0
    %1096 = vmatpush1.bf16.msra.mxu0 0
    %1097 = vmatprep.subr.bf16.mxu0 0
    %1098 = vmatpush1.bf16.msra.mxu0 0
    %1099 = vmatprep.subr.bf16.mxu0 0
    %1100 = vmatpush1.bf16.msra.mxu0 0
    %1101 = vmatprep.subr.bf16.mxu0 0
    %1102 = vmatpush1.bf16.msra.mxu0 0
    %1103 = vmatprep.subr.bf16.mxu0 0
    %1104 = vmatpush1.bf16.msra.mxu0 0
    %1105 = vmatprep.mubr.bf16.mxu0 0
    %1106 = vmatmul.mubr.bf16.gmra.mrb[0].mxu0 %v1007
    %v1107 = vpop.f32.mrb[0].mxu0
    %v1108 = vadd.f32 0.0, %v1107
    %v1109 = vpop.f32.mrb[0].mxu0
    %v1110 = vpop.f32.mrb[0].mxu0
    %v1111 = vadd.f32 0.0, %v1110
    %v1112 = vpop.f32.mrb[0].mxu0
    %1113 = vmatprep.mubr.bf16.mxu0 0
    %1114 = vmatmul.mubr.bf16.gmra.mrb[0].mxu0 %v1008
    %v1115 = vpop.f32.mrb[0].mxu0
    %v1116 = vadd.f32 0.0, %v1115
    %v1117 = vpop.f32.mrb[0].mxu0
    %v1118 = vpop.f32.mrb[0].mxu0
    %v1119 = vadd.f32 0.0, %v1118
    %v1120 = vpop.f32.mrb[0].mxu0
    %1121 = vdwg.mxu0
    %v1122 = vadd.f32 %v766, %v1108
    %v1123 = vadd.f32 %v770, %v1111
    %v1124 = vadd.f32 %v776, %v1116
    %v1125 = vadd.f32 %v780, %v1119
    %v1126 = vpack.c.bf16 %v1123, %v1122
    %v1127 = vpack.c.bf16 %v1125, %v1124
    %v1128 = vld [vmem:[#allocation8] sm:$0xff]
    %v1129 = vld [vmem:[#allocation8 + $0x8] sm:$0xff]
    %v1130 = vld [vmem:[#allocation8 + $0x10] sm:$0xff]
    %v1131 = vld [vmem:[#allocation8 + $0x18] sm:$0xff]
    %v1132 = vld [vmem:[#allocation8 + $0x20] sm:$0xff]
    %v1133 = vld [vmem:[#allocation8 + $0x28] sm:$0xff]
    %v1134 = vld [vmem:[#allocation8 + $0x30] sm:$0xff]
    %v1135 = vld [vmem:[#allocation8 + $0x38] sm:$0xff]
    %v1136 = vld [vmem:[#allocation8 + $0x40] sm:$0xff]
    %v1137 = vld [vmem:[#allocation8 + $0x48] sm:$0xff]
    %v1138 = vld [vmem:[#allocation8 + $0x50] sm:$0xff]
    %v1139 = vld [vmem:[#allocation8 + $0x58] sm:$0xff]
    %v1140 = vld [vmem:[#allocation8 + $0x60] sm:$0xff]
    %v1141 = vld [vmem:[#allocation8 + $0x68] sm:$0xff]
    %v1142 = vld [vmem:[#allocation8 + $0x70] sm:$0xff]
    %v1143 = vld [vmem:[#allocation8 + $0x78] sm:$0xff]
    %v1160 = vunpack.c.l.b16 %v1128
    %v1161 = vunpack.c.h.b16 %v1128
    %v1162 = vunpack.c.l.b16 %v1129
    %v1163 = vunpack.c.h.b16 %v1129
    %v1164 = vunpack.c.l.b16 %v1130
    %v1165 = vunpack.c.h.b16 %v1130
    %v1166 = vunpack.c.l.b16 %v1131
    %v1167 = vunpack.c.h.b16 %v1131
    %v1168 = vunpack.c.l.b16 %v1132
    %v1169 = vunpack.c.h.b16 %v1132
    %v1170 = vunpack.c.l.b16 %v1133
    %v1171 = vunpack.c.h.b16 %v1133
    %v1172 = vunpack.c.l.b16 %v1134
    %v1173 = vunpack.c.h.b16 %v1134
    %v1174 = vunpack.c.l.b16 %v1135
    %v1175 = vunpack.c.h.b16 %v1135
    %v1176 = vunpack.c.l.b16 %v1136
    %v1177 = vunpack.c.h.b16 %v1136
    %v1178 = vunpack.c.l.b16 %v1137
    %v1179 = vunpack.c.h.b16 %v1137
    %v1180 = vunpack.c.l.b16 %v1138
    %v1181 = vunpack.c.h.b16 %v1138
    %v1182 = vunpack.c.l.b16 %v1139
    %v1183 = vunpack.c.h.b16 %v1139
    %v1184 = vunpack.c.l.b16 %v1140
    %v1185 = vunpack.c.h.b16 %v1140
    %v1186 = vunpack.c.l.b16 %v1141
    %v1187 = vunpack.c.h.b16 %v1141
    %v1188 = vunpack.c.l.b16 %v1142
    %v1189 = vunpack.c.h.b16 %v1142
    %v1190 = vunpack.c.l.b16 %v1143
    %v1191 = vunpack.c.h.b16 %v1143
    %v1192 = vpack.c.b16 %v1162, %v1160
    %v1193 = vpack.c.b16 %v1163, %v1161
    %v1194 = vpack.c.b16 %v1166, %v1164
    %v1195 = vpack.c.b16 %v1167, %v1165
    %v1196 = vpack.c.b16 %v1170, %v1168
    %v1197 = vpack.c.b16 %v1171, %v1169
    %v1198 = vpack.c.b16 %v1174, %v1172
    %v1199 = vpack.c.b16 %v1175, %v1173
    %v1200 = vpack.c.b16 %v1178, %v1176
    %v1201 = vpack.c.b16 %v1179, %v1177
    %v1202 = vpack.c.b16 %v1182, %v1180
    %v1203 = vpack.c.b16 %v1183, %v1181
    %v1204 = vpack.c.b16 %v1186, %v1184
    %v1205 = vpack.c.b16 %v1187, %v1185
    %v1206 = vpack.c.b16 %v1190, %v1188
    %v1207 = vpack.c.b16 %v1191, %v1189
    %1224 = vmatprep.subr.bf16.mxu0 %v1193
    %1225 = vmatpush1.bf16.msra.mxu0 %v1192
    %1226 = vmatprep.subr.bf16.mxu0 %v1195
    %1227 = vmatpush1.bf16.msra.mxu0 %v1194
    %1228 = vmatprep.subr.bf16.mxu0 %v1197
    %1229 = vmatpush1.bf16.msra.mxu0 %v1196
    %1230 = vmatprep.subr.bf16.mxu0 %v1199
    %1231 = vmatpush1.bf16.msra.mxu0 %v1198
    %1232 = vmatprep.subr.bf16.mxu0 %v1201
    %1233 = vmatpush1.bf16.msra.mxu0 %v1200
    %1234 = vmatprep.subr.bf16.mxu0 %v1203
    %1235 = vmatpush1.bf16.msra.mxu0 %v1202
    %1236 = vmatprep.subr.bf16.mxu0 %v1205
    %1237 = vmatpush1.bf16.msra.mxu0 %v1204
    %1238 = vmatprep.subr.bf16.mxu0 %v1207
    %1239 = vmatpush1.bf16.msra.mxu0 %v1206
    %1240 = vmatprep.subr.bf16.mxu0 0
    %1241 = vmatpush1.bf16.msra.mxu0 0
    %1242 = vmatprep.subr.bf16.mxu0 0
    %1243 = vmatpush1.bf16.msra.mxu0 0
    %1244 = vmatprep.subr.bf16.mxu0 0
    %1245 = vmatpush1.bf16.msra.mxu0 0
    %1246 = vmatprep.subr.bf16.mxu0 0
    %1247 = vmatpush1.bf16.msra.mxu0 0
    %1248 = vmatprep.subr.bf16.mxu0 0
    %1249 = vmatpush1.bf16.msra.mxu0 0
    %1250 = vmatprep.subr.bf16.mxu0 0
    %1251 = vmatpush1.bf16.msra.mxu0 0
    %1252 = vmatprep.subr.bf16.mxu0 0
    %1253 = vmatpush1.bf16.msra.mxu0 0
    %1254 = vmatprep.subr.bf16.mxu0 0
    %1255 = vmatpush1.bf16.msra.mxu0 0
    %1256 = vmatprep.mubr.bf16.mxu0 0
    %1257 = vmatmul.mubr.bf16.gmra.mrb[0].mxu0 %v1126
    %v1258 = vpop.f32.mrb[0].mxu0
    %v1259 = vadd.f32 0.0, %v1258
    %v1260 = vpop.f32.mrb[0].mxu0
    %v1261 = vadd.f32 0.0, %v1260
    %v1262 = vpop.f32.mrb[0].mxu0
    %v1263 = vadd.f32 0.0, %v1262
    %v1264 = vpop.f32.mrb[0].mxu0
    %v1265 = vadd.f32 0.0, %v1264
    %1266 = vmatprep.mubr.bf16.mxu0 0
    %1267 = vmatmul.mubr.bf16.gmra.mrb[0].mxu0 %v1127
    %v1268 = vpop.f32.mrb[0].mxu0
    %v1269 = vadd.f32 0.0, %v1268
    %v1270 = vpop.f32.mrb[0].mxu0
    %v1271 = vadd.f32 0.0, %v1270
    %v1272 = vpop.f32.mrb[0].mxu0
    %v1273 = vadd.f32 0.0, %v1272
    %v1274 = vpop.f32.mrb[0].mxu0
    %v1275 = vadd.f32 0.0, %v1274
    %1276 = vdwg.mxu0
    %v1277 = vmax.f32 %v1259, 0.0
    %v1278 = vmax.f32 %v1261, 0.0
    %v1279 = vmax.f32 %v1263, 0.0
    %v1280 = vmax.f32 %v1265, 0.0
    %v1281 = vmax.f32 %v1269, 0.0
    %v1282 = vmax.f32 %v1271, 0.0
    %v1283 = vmax.f32 %v1273, 0.0
    %v1284 = vmax.f32 %v1275, 0.0
    %v1285 = vpack.c.bf16 %v1279, %v1277
    %v1286 = vpack.c.bf16 %v1280, %v1278
    %v1287 = vpack.c.bf16 %v1283, %v1281
    %v1288 = vpack.c.bf16 %v1284, %v1282
    %v1289 = vld [vmem:[#allocation10] sm:$0xf]
    %v1290 = vld [vmem:[#allocation10 + $0x4] sm:$0xf]
    %v1291 = vld [vmem:[#allocation10 + $0x8] sm:$0xf]
    %v1292 = vld [vmem:[#allocation10 + $0xc] sm:$0xf]
    %v1293 = vld [vmem:[#allocation10 + $0x10] sm:$0xf]
    %v1294 = vld [vmem:[#allocation10 + $0x14] sm:$0xf]
    %v1295 = vld [vmem:[#allocation10 + $0x18] sm:$0xf]
    %v1296 = vld [vmem:[#allocation10 + $0x1c] sm:$0xf]
    %v1297 = vld [vmem:[#allocation10 + $0x20] sm:$0xf]
    %v1298 = vld [vmem:[#allocation10 + $0x24] sm:$0xf]
    %v1299 = vld [vmem:[#allocation10 + $0x28] sm:$0xf]
    %v1300 = vld [vmem:[#allocation10 + $0x2c] sm:$0xf]
    %v1301 = vld [vmem:[#allocation10 + $0x30] sm:$0xf]
    %v1302 = vld [vmem:[#allocation10 + $0x34] sm:$0xf]
    %v1303 = vld [vmem:[#allocation10 + $0x38] sm:$0xf]
    %v1304 = vld [vmem:[#allocation10 + $0x3c] sm:$0xf]
    %v1305 = vld [vmem:[#allocation10 + $0x40] sm:$0xf]
    %v1306 = vld [vmem:[#allocation10 + $0x44] sm:$0xf]
    %v1307 = vld [vmem:[#allocation10 + $0x48] sm:$0xf]
    %v1308 = vld [vmem:[#allocation10 + $0x4c] sm:$0xf]
    %v1309 = vld [vmem:[#allocation10 + $0x50] sm:$0xf]
    %v1310 = vld [vmem:[#allocation10 + $0x54] sm:$0xf]
    %v1311 = vld [vmem:[#allocation10 + $0x58] sm:$0xf]
    %v1312 = vld [vmem:[#allocation10 + $0x5c] sm:$0xf]
    %v1313 = vld [vmem:[#allocation10 + $0x60] sm:$0xf]
    %v1314 = vld [vmem:[#allocation10 + $0x64] sm:$0xf]
    %v1315 = vld [vmem:[#allocation10 + $0x68] sm:$0xf]
    %v1316 = vld [vmem:[#allocation10 + $0x6c] sm:$0xf]
    %v1317 = vld [vmem:[#allocation10 + $0x70] sm:$0xf]
    %v1318 = vld [vmem:[#allocation10 + $0x74] sm:$0xf]
    %v1319 = vld [vmem:[#allocation10 + $0x78] sm:$0xf]
    %v1320 = vld [vmem:[#allocation10 + $0x7c] sm:$0xf]
    %v1353 = vunpack.c.l.b16 %v1289
    %v1354 = vunpack.c.l.b16 %v1290
    %v1355 = vunpack.c.l.b16 %v1291
    %v1356 = vunpack.c.l.b16 %v1292
    %v1357 = vunpack.c.l.b16 %v1293
    %v1358 = vunpack.c.l.b16 %v1294
    %v1359 = vunpack.c.l.b16 %v1295
    %v1360 = vunpack.c.l.b16 %v1296
    %v1361 = vunpack.c.l.b16 %v1297
    %v1362 = vunpack.c.l.b16 %v1298
    %v1363 = vunpack.c.l.b16 %v1299
    %v1364 = vunpack.c.l.b16 %v1300
    %v1365 = vunpack.c.l.b16 %v1301
    %v1366 = vunpack.c.l.b16 %v1302
    %v1367 = vunpack.c.l.b16 %v1303
    %v1368 = vunpack.c.l.b16 %v1304
    %v1369 = vunpack.c.l.b16 %v1305
    %v1370 = vunpack.c.l.b16 %v1306
    %v1371 = vunpack.c.l.b16 %v1307
    %v1372 = vunpack.c.l.b16 %v1308
    %v1373 = vunpack.c.l.b16 %v1309
    %v1374 = vunpack.c.l.b16 %v1310
    %v1375 = vunpack.c.l.b16 %v1311
    %v1376 = vunpack.c.l.b16 %v1312
    %v1377 = vunpack.c.l.b16 %v1313
    %v1378 = vunpack.c.l.b16 %v1314
    %v1379 = vunpack.c.l.b16 %v1315
    %v1380 = vunpack.c.l.b16 %v1316
    %v1381 = vunpack.c.l.b16 %v1317
    %v1382 = vunpack.c.l.b16 %v1318
    %v1383 = vunpack.c.l.b16 %v1319
    %v1384 = vunpack.c.l.b16 %v1320
    %v1385 = vpack.c.b16 %v1354, %v1353
    %v1386 = vpack.c.b16 %v1356, %v1355
    %v1387 = vpack.c.b16 %v1358, %v1357
    %v1388 = vpack.c.b16 %v1360, %v1359
    %v1389 = vpack.c.b16 %v1362, %v1361
    %v1390 = vpack.c.b16 %v1364, %v1363
    %v1391 = vpack.c.b16 %v1366, %v1365
    %v1392 = vpack.c.b16 %v1368, %v1367
    %v1393 = vpack.c.b16 %v1370, %v1369
    %v1394 = vpack.c.b16 %v1372, %v1371
    %v1395 = vpack.c.b16 %v1374, %v1373
    %v1396 = vpack.c.b16 %v1376, %v1375
    %v1397 = vpack.c.b16 %v1378, %v1377
    %v1398 = vpack.c.b16 %v1380, %v1379
    %v1399 = vpack.c.b16 %v1382, %v1381
    %v1400 = vpack.c.b16 %v1384, %v1383
    %1417 = vmatprep.subr.bf16.mxu0 0
    %1418 = vmatpush1.bf16.msra.mxu0 %v1385
    %1419 = vmatprep.subr.bf16.mxu0 0
    %1420 = vmatpush1.bf16.msra.mxu0 %v1386
    %1421 = vmatprep.subr.bf16.mxu0 0
    %1422 = vmatpush1.bf16.msra.mxu0 %v1387
    %1423 = vmatprep.subr.bf16.mxu0 0
    %1424 = vmatpush1.bf16.msra.mxu0 %v1388
    %1425 = vmatprep.subr.bf16.mxu0 0
    %1426 = vmatpush1.bf16.msra.mxu0 %v1389
    %1427 = vmatprep.subr.bf16.mxu0 0
    %1428 = vmatpush1.bf16.msra.mxu0 %v1390
    %1429 = vmatprep.subr.bf16.mxu0 0
    %1430 = vmatpush1.bf16.msra.mxu0 %v1391
    %1431 = vmatprep.subr.bf16.mxu0 0
    %1432 = vmatpush1.bf16.msra.mxu0 %v1392
    %1433 = vmatprep.subr.bf16.mxu0 0
    %1434 = vmatpush1.bf16.msra.mxu0 %v1393
    %1435 = vmatprep.subr.bf16.mxu0 0
    %1436 = vmatpush1.bf16.msra.mxu0 %v1394
    %1437 = vmatprep.subr.bf16.mxu0 0
    %1438 = vmatpush1.bf16.msra.mxu0 %v1395
    %1439 = vmatprep.subr.bf16.mxu0 0
    %1440 = vmatpush1.bf16.msra.mxu0 %v1396
    %1441 = vmatprep.subr.bf16.mxu0 0
    %1442 = vmatpush1.bf16.msra.mxu0 %v1397
    %1443 = vmatprep.subr.bf16.mxu0 0
    %1444 = vmatpush1.bf16.msra.mxu0 %v1398
    %1445 = vmatprep.subr.bf16.mxu0 0
    %1446 = vmatpush1.bf16.msra.mxu0 %v1399
    %1447 = vmatprep.subr.bf16.mxu0 0
    %1448 = vmatpush1.bf16.msra.mxu0 %v1400
    %1449 = vmatprep.mubr.bf16.mxu0 %v1286
    %1450 = vmatmul.mubr.bf16.gmra.mrb[0].mxu0 %v1285
    %v1451 = vpop.f32.mrb[0].mxu0
    %v1452 = vadd.f32 0.0, %v1451
    %v1453 = vpop.f32.mrb[0].mxu0
    %v1454 = vpop.f32.mrb[0].mxu0
    %v1455 = vadd.f32 0.0, %v1454
    %v1456 = vpop.f32.mrb[0].mxu0
    %1457 = vmatprep.mubr.bf16.mxu0 %v1288
    %1458 = vmatmul.mubr.bf16.gmra.mrb[0].mxu0 %v1287
    %v1459 = vpop.f32.mrb[0].mxu0
    %v1460 = vadd.f32 0.0, %v1459
    %v1461 = vpop.f32.mrb[0].mxu0
    %v1462 = vpop.f32.mrb[0].mxu0
    %v1463 = vadd.f32 0.0, %v1462
    %v1464 = vpop.f32.mrb[0].mxu0
    %1465 = vdwg.mxu0
    %v1466 = vadd.f32 %v1122, %v1452
    %v1467 = vadd.f32 %v1123, %v1455
    %v1468 = vadd.f32 %v1124, %v1460
    %v1469 = vadd.f32 %v1125, %v1463
    %v1470 = vpack.c.bf16 %v1467, %v1466
    %v1471 = vpack.c.bf16 %v1469, %v1468
    %v1472 = vld [vmem:[#allocation11] sm:$0xff]
    %v1473 = vld [vmem:[#allocation11 + $0x8] sm:$0xff]
    %v1474 = vld [vmem:[#allocation11 + $0x10] sm:$0xff]
    %v1475 = vld [vmem:[#allocation11 + $0x18] sm:$0xff]
    %v1476 = vld [vmem:[#allocation11 + $0x20] sm:$0xff]
    %v1477 = vld [vmem:[#allocation11 + $0x28] sm:$0xff]
    %v1478 = vld [vmem:[#allocation11 + $0x30] sm:$0xff]
    %v1479 = vld [vmem:[#allocation11 + $0x38] sm:$0xff]
    %v1480 = vld [vmem:[#allocation11 + $0x40] sm:$0xff]
    %v1481 = vld [vmem:[#allocation11 + $0x48] sm:$0xff]
    %v1482 = vld [vmem:[#allocation11 + $0x50] sm:$0xff]
    %v1483 = vld [vmem:[#allocation11 + $0x58] sm:$0xff]
    %v1484 = vld [vmem:[#allocation11 + $0x60] sm:$0xff]
    %v1485 = vld [vmem:[#allocation11 + $0x68] sm:$0xff]
    %v1486 = vld [vmem:[#allocation11 + $0x70] sm:$0xff]
    %v1487 = vld [vmem:[#allocation11 + $0x78] sm:$0xff]
    %v1504 = vunpack.c.l.b16 %v1472
    %v1505 = vunpack.c.h.b16 %v1472
    %v1506 = vunpack.c.l.b16 %v1473
    %v1507 = vunpack.c.h.b16 %v1473
    %v1508 = vunpack.c.l.b16 %v1474
    %v1509 = vunpack.c.h.b16 %v1474
    %v1510 = vunpack.c.l.b16 %v1475
    %v1511 = vunpack.c.h.b16 %v1475
    %v1512 = vunpack.c.l.b16 %v1476
    %v1513 = vunpack.c.h.b16 %v1476
    %v1514 = vunpack.c.l.b16 %v1477
    %v1515 = vunpack.c.h.b16 %v1477
    %v1516 = vunpack.c.l.b16 %v1478
    %v1517 = vunpack.c.h.b16 %v1478
    %v1518 = vunpack.c.l.b16 %v1479
    %v1519 = vunpack.c.h.b16 %v1479
    %v1520 = vunpack.c.l.b16 %v1480
    %v1521 = vunpack.c.h.b16 %v1480
    %v1522 = vunpack.c.l.b16 %v1481
    %v1523 = vunpack.c.h.b16 %v1481
    %v1524 = vunpack.c.l.b16 %v1482
    %v1525 = vunpack.c.h.b16 %v1482
    %v1526 = vunpack.c.l.b16 %v1483
    %v1527 = vunpack.c.h.b16 %v1483
    %v1528 = vunpack.c.l.b16 %v1484
    %v1529 = vunpack.c.h.b16 %v1484
    %v1530 = vunpack.c.l.b16 %v1485
    %v1531 = vunpack.c.h.b16 %v1485
    %v1532 = vunpack.c.l.b16 %v1486
    %v1533 = vunpack.c.h.b16 %v1486
    %v1534 = vunpack.c.l.b16 %v1487
    %v1535 = vunpack.c.h.b16 %v1487
    %v1536 = vpack.c.b16 %v1506, %v1504
    %v1537 = vpack.c.b16 %v1507, %v1505
    %v1538 = vpack.c.b16 %v1510, %v1508
    %v1539 = vpack.c.b16 %v1511, %v1509
    %v1540 = vpack.c.b16 %v1514, %v1512
    %v1541 = vpack.c.b16 %v1515, %v1513
    %v1542 = vpack.c.b16 %v1518, %v1516
    %v1543 = vpack.c.b16 %v1519, %v1517
    %v1544 = vpack.c.b16 %v1522, %v1520
    %v1545 = vpack.c.b16 %v1523, %v1521
    %v1546 = vpack.c.b16 %v1526, %v1524
    %v1547 = vpack.c.b16 %v1527, %v1525
    %v1548 = vpack.c.b16 %v1530, %v1528
    %v1549 = vpack.c.b16 %v1531, %v1529
    %v1550 = vpack.c.b16 %v1534, %v1532
    %v1551 = vpack.c.b16 %v1535, %v1533
    %1568 = vmatprep.subr.bf16.mxu0 %v1537
    %1569 = vmatpush1.bf16.msra.mxu0 %v1536
    %1570 = vmatprep.subr.bf16.mxu0 %v1539
    %1571 = vmatpush1.bf16.msra.mxu0 %v1538
    %1572 = vmatprep.subr.bf16.mxu0 %v1541
    %1573 = vmatpush1.bf16.msra.mxu0 %v1540
    %1574 = vmatprep.subr.bf16.mxu0 %v1543
    %1575 = vmatpush1.bf16.msra.mxu0 %v1542
    %1576 = vmatprep.subr.bf16.mxu0 %v1545
    %1577 = vmatpush1.bf16.msra.mxu0 %v1544
    %1578 = vmatprep.subr.bf16.mxu0 %v1547
    %1579 = vmatpush1.bf16.msra.mxu0 %v1546
    %1580 = vmatprep.subr.bf16.mxu0 %v1549
    %1581 = vmatpush1.bf16.msra.mxu0 %v1548
    %1582 = vmatprep.subr.bf16.mxu0 %v1551
    %1583 = vmatpush1.bf16.msra.mxu0 %v1550
    %1584 = vmatprep.subr.bf16.mxu0 0
    %1585 = vmatpush1.bf16.msra.mxu0 0
    %1586 = vmatprep.subr.bf16.mxu0 0
    %1587 = vmatpush1.bf16.msra.mxu0 0
    %1588 = vmatprep.subr.bf16.mxu0 0
    %1589 = vmatpush1.bf16.msra.mxu0 0
    %1590 = vmatprep.subr.bf16.mxu0 0
    %1591 = vmatpush1.bf16.msra.mxu0 0
    %1592 = vmatprep.subr.bf16.mxu0 0
    %1593 = vmatpush1.bf16.msra.mxu0 0
    %1594 = vmatprep.subr.bf16.mxu0 0
    %1595 = vmatpush1.bf16.msra.mxu0 0
    %1596 = vmatprep.subr.bf16.mxu0 0
    %1597 = vmatpush1.bf16.msra.mxu0 0
    %1598 = vmatprep.subr.bf16.mxu0 0
    %1599 = vmatpush1.bf16.msra.mxu0 0
    %1600 = vmatprep.mubr.bf16.mxu0 0
    %1601 = vmatmul.mubr.bf16.gmra.mrb[0].mxu0 %v1470
    %v1602 = vpop.f32.mrb[0].mxu0
    %v1603 = vadd.f32 0.0, %v1602
    %v1604 = vpop.f32.mrb[0].mxu0
    %v1605 = vadd.f32 0.0, %v1604
    %v1606 = vpop.f32.mrb[0].mxu0
    %v1607 = vadd.f32 0.0, %v1606
    %v1608 = vpop.f32.mrb[0].mxu0
    %v1609 = vadd.f32 0.0, %v1608
    %1610 = vmatprep.mubr.bf16.mxu0 0
    %1611 = vmatmul.mubr.bf16.gmra.mrb[0].mxu0 %v1471
    %v1612 = vpop.f32.mrb[0].mxu0
    %v1613 = vadd.f32 0.0, %v1612
    %v1614 = vpop.f32.mrb[0].mxu0
    %v1615 = vadd.f32 0.0, %v1614
    %v1616 = vpop.f32.mrb[0].mxu0
    %v1617 = vadd.f32 0.0, %v1616
    %v1618 = vpop.f32.mrb[0].mxu0
    %v1619 = vadd.f32 0.0, %v1618
    %1620 = vdwg.mxu0
    %v1621 = vpack.c.bf16 %v1607, %v1603
    %v1622 = vpack.c.bf16 %v1609, %v1605
    %v1623 = vpack.c.bf16 %v1617, %v1613
    %v1624 = vpack.c.bf16 %v1619, %v1615
    %v1625 = vld [vmem:[%s5] sm:$0xf]
    %v1626 = vld [vmem:[%s5 + $0x4] sm:$0xf]
    %v1629 = vunpack.c.l.b16 %v1625
    %v1630 = vunpack.c.l.b16 %v1626
    %v1631 = vpack.c.b16 %v1630, %v1629
    %1633 = vmatprep.subr.bf16.mxu0 0
    %1634 = vmatpush1.bf16.xpose.msra.mxu0 %v1621
    %1635 = vmatprep.subr.bf16.mxu0 0
    %1636 = vmatpush1.bf16.xpose.msra.mxu0 %v1623
    %1637 = vmatprep.subr.bf16.mxu0 0
    %1638 = vmatpush1.bf16.xpose.msra.mxu0 0
    %1639 = vmatprep.subr.bf16.mxu0 0
    %1640 = vmatpush1.bf16.xpose.msra.mxu0 0
    %1641 = vmatprep.subr.bf16.mxu0 0
    %1642 = vmatpush1.bf16.xpose.msra.mxu0 0
    %1643 = vmatprep.subr.bf16.mxu0 0
    %1644 = vmatpush1.bf16.xpose.msra.mxu0 0
    %1645 = vmatprep.subr.bf16.mxu0 0
    %1646 = vmatpush1.bf16.xpose.msra.mxu0 0
    %1647 = vmatprep.subr.bf16.mxu0 0
    %1648 = vmatpush1.bf16.xpose.msra.mxu0 0
    %1649 = vmatprep.subr.bf16.mxu0 0
    %1650 = vmatpush1.bf16.xpose.msra.mxu0 0
    %1651 = vmatprep.subr.bf16.mxu0 0
    %1652 = vmatpush1.bf16.xpose.msra.mxu0 0
    %1653 = vmatprep.subr.bf16.mxu0 0
    %1654 = vmatpush1.bf16.xpose.msra.mxu0 0
    %1655 = vmatprep.subr.bf16.mxu0 0
    %1656 = vmatpush1.bf16.xpose.msra.mxu0 0
    %1657 = vmatprep.subr.bf16.mxu0 0
    %1658 = vmatpush1.bf16.xpose.msra.mxu0 0
    %1659 = vmatprep.subr.bf16.mxu0 0
    %1660 = vmatpush1.bf16.xpose.msra.mxu0 0
    %1661 = vmatprep.subr.bf16.mxu0 0
    %1662 = vmatpush1.bf16.xpose.msra.mxu0 0
    %1663 = vmatprep.subr.bf16.mxu0 0
    %1664 = vmatpush1.bf16.xpose.msra.mxu0 0
    %1665 = vmatprep.mubr.bf16.mxu0 0
    %1666 = vmatmul.mubr.bf16.gmra.mrb[0].mxu0 %v1631
    %v1667 = vpop.f32.mrb[0].mxu0
    %v1668 = vadd.f32 0.0, %v1667
    %v1669 = vpop.f32.mrb[0].mxu0
    %v1670 = vpop.f32.mrb[0].mxu0
    %v1671 = vadd.f32 0.0, %v1670
    %v1672 = vpop.f32.mrb[0].mxu0
    %1673 = vdwg.mxu0
    %v1674 = vmul.f32 %v1668, 0.088388346
    %v1675 = vmul.f32 %v1671, 0.088388346
    %v1676 = vshra.s32 %v136, 3
    %v1677 = vshra.s32 %v137, 3
    %vm1678 = vcmp.eq.s32.totalorder %v1676, %v896
    %vm1679 = vcmp.eq.s32.totalorder %v1677, %v896
    %v1680 = vsel %vm1678, %v1674, -1e+30
    %v1681 = vsel %vm1679, %v1675, -1e+30
    %v1682 = vsel %vm905, %v1680, -inf
    %1683 = vmax.xlane.f32.xlu0 %v1682
    %v1684 = vpop.xlane.xlu0 %1683
    %v1685 = vsel %vm905, %v1681, -inf
    %1686 = vmax.xlane.f32.xlu0 %v1685
    %v1687 = vpop.xlane.xlu0 %1686
    %v1688 = vsub.f32 %v1680, %v1684
    %v1689 = vsub.f32 %v1681, %v1687
    %v1690 = vmul.f32 %v1688, 1.442695
    %v1691 = vpow.pop %v1690
    %v1692 = vmul.f32 %v1689, 1.442695
    %v1693 = vpow.pop %v1692
    %v1694 = vsel %vm905, %v1691, 0.0
    %1695 = vadd.xlane.f32.xlu0 %v1694
    %v1696 = vpop.xlane.xlu0 %1695
    %v1697 = vsel %vm905, %v1693, 0.0
    %1698 = vadd.xlane.f32.xlu0 %v1697
    %v1699 = vpop.xlane.xlu0 %1698
    %v1700 = vrcp.pop %v1696
    %v1701 = vrcp.pop %v1699
    %v1702 = vmul.f32 %v1691, %v1700
    %v1703 = vmul.f32 %v1693, %v1701
    %v1704 = vpack.c.bf16 %v1703, %v1702
    %v1706 = vsel %vm905, %v1704, 0
    %1708 = vmatprep.subr.bf16.mxu0 0
    %1709 = vmatpush1.bf16.msra.mxu0 %v1622
    %1710 = vmatprep.subr.bf16.mxu0 0
    %1711 = vmatpush1.bf16.msra.mxu0 %v1624
    %1712 = vmatprep.subr.bf16.mxu0 0
    %1713 = vmatpush1.bf16.msra.mxu0 0
    %1714 = vmatprep.subr.bf16.mxu0 0
    %1715 = vmatpush1.bf16.msra.mxu0 0
    %1716 = vmatprep.subr.bf16.mxu0 0
    %1717 = vmatpush1.bf16.msra.mxu0 0
    %1718 = vmatprep.subr.bf16.mxu0 0
    %1719 = vmatpush1.bf16.msra.mxu0 0
    %1720 = vmatprep.subr.bf16.mxu0 0
    %1721 = vmatpush1.bf16.msra.mxu0 0
    %1722 = vmatprep.subr.bf16.mxu0 0
    %1723 = vmatpush1.bf16.msra.mxu0 0
    %1724 = vmatprep.subr.bf16.mxu0 0
    %1725 = vmatpush1.bf16.msra.mxu0 0
    %1726 = vmatprep.subr.bf16.mxu0 0
    %1727 = vmatpush1.bf16.msra.mxu0 0
    %1728 = vmatprep.subr.bf16.mxu0 0
    %1729 = vmatpush1.bf16.msra.mxu0 0
    %1730 = vmatprep.subr.bf16.mxu0 0
    %1731 = vmatpush1.bf16.msra.mxu0 0
    %1732 = vmatprep.subr.bf16.mxu0 0
    %1733 = vmatpush1.bf16.msra.mxu0 0
    %1734 = vmatprep.subr.bf16.mxu0 0
    %1735 = vmatpush1.bf16.msra.mxu0 0
    %1736 = vmatprep.subr.bf16.mxu0 0
    %1737 = vmatpush1.bf16.msra.mxu0 0
    %1738 = vmatprep.subr.bf16.mxu0 0
    %1739 = vmatpush1.bf16.msra.mxu0 0
    %1740 = vmatprep.mubr.bf16.mxu0 0
    %1741 = vmatmul.mubr.bf16.gmra.mrb[0].mxu0 %v1706
    %v1742 = vpop.f32.mrb[0].mxu0
    %v1743 = vadd.f32 0.0, %v1742
    %v1744 = vpop.f32.mrb[0].mxu0
    %v1745 = vpop.f32.mrb[0].mxu0
    %v1746 = vadd.f32 0.0, %v1745
    %v1747 = vpop.f32.mrb[0].mxu0
    %1748 = vdwg.mxu0
    %v1749 = vpack.c.bf16 %v1746, %v1743
    %v1750 = vld [vmem:[#allocation13] sm:$0xff]
    %v1751 = vld [vmem:[#allocation13 + $0x8] sm:$0xff]
    %v1752 = vld [vmem:[#allocation13 + $0x10] sm:$0xff]
    %v1753 = vld [vmem:[#allocation13 + $0x18] sm:$0xff]
    %v1754 = vld [vmem:[#allocation13 + $0x20] sm:$0xff]
    %v1755 = vld [vmem:[#allocation13 + $0x28] sm:$0xff]
    %v1756 = vld [vmem:[#allocation13 + $0x30] sm:$0xff]
    %v1757 = vld [vmem:[#allocation13 + $0x38] sm:$0xff]
    %v1758 = vld [vmem:[#allocation13 + $0x40] sm:$0xff]
    %v1759 = vld [vmem:[#allocation13 + $0x48] sm:$0xff]
    %v1760 = vld [vmem:[#allocation13 + $0x50] sm:$0xff]
    %v1761 = vld [vmem:[#allocation13 + $0x58] sm:$0xff]
    %v1762 = vld [vmem:[#allocation13 + $0x60] sm:$0xff]
    %v1763 = vld [vmem:[#allocation13 + $0x68] sm:$0xff]
    %v1764 = vld [vmem:[#allocation13 + $0x70] sm:$0xff]
    %v1765 = vld [vmem:[#allocation13 + $0x78] sm:$0xff]
    %v1782 = vunpack.c.l.b16 %v1750
    %v1783 = vunpack.c.h.b16 %v1750
    %v1784 = vunpack.c.l.b16 %v1751
    %v1785 = vunpack.c.h.b16 %v1751
    %v1786 = vunpack.c.l.b16 %v1752
    %v1787 = vunpack.c.h.b16 %v1752
    %v1788 = vunpack.c.l.b16 %v1753
    %v1789 = vunpack.c.h.b16 %v1753
    %v1790 = vunpack.c.l.b16 %v1754
    %v1791 = vunpack.c.h.b16 %v1754
    %v1792 = vunpack.c.l.b16 %v1755
    %v1793 = vunpack.c.h.b16 %v1755
    %v1794 = vunpack.c.l.b16 %v1756
    %v1795 = vunpack.c.h.b16 %v1756
    %v1796 = vunpack.c.l.b16 %v1757
    %v1797 = vunpack.c.h.b16 %v1757
    %v1798 = vunpack.c.l.b16 %v1758
    %v1799 = vunpack.c.h.b16 %v1758
    %v1800 = vunpack.c.l.b16 %v1759
    %v1801 = vunpack.c.h.b16 %v1759
    %v1802 = vunpack.c.l.b16 %v1760
    %v1803 = vunpack.c.h.b16 %v1760
    %v1804 = vunpack.c.l.b16 %v1761
    %v1805 = vunpack.c.h.b16 %v1761
    %v1806 = vunpack.c.l.b16 %v1762
    %v1807 = vunpack.c.h.b16 %v1762
    %v1808 = vunpack.c.l.b16 %v1763
    %v1809 = vunpack.c.h.b16 %v1763
    %v1810 = vunpack.c.l.b16 %v1764
    %v1811 = vunpack.c.h.b16 %v1764
    %v1812 = vunpack.c.l.b16 %v1765
    %v1813 = vunpack.c.h.b16 %v1765
    %v1814 = vpack.c.b16 %v1784, %v1782
    %v1815 = vpack.c.b16 %v1785, %v1783
    %v1816 = vpack.c.b16 %v1788, %v1786
    %v1817 = vpack.c.b16 %v1789, %v1787
    %v1818 = vpack.c.b16 %v1792, %v1790
    %v1819 = vpack.c.b16 %v1793, %v1791
    %v1820 = vpack.c.b16 %v1796, %v1794
    %v1821 = vpack.c.b16 %v1797, %v1795
    %v1822 = vpack.c.b16 %v1800, %v1798
    %v1823 = vpack.c.b16 %v1801, %v1799
    %v1824 = vpack.c.b16 %v1804, %v1802
    %v1825 = vpack.c.b16 %v1805, %v1803
    %v1826 = vpack.c.b16 %v1808, %v1806
    %v1827 = vpack.c.b16 %v1809, %v1807
    %v1828 = vpack.c.b16 %v1812, %v1810
    %v1829 = vpack.c.b16 %v1813, %v1811
    %1846 = vmatprep.subr.bf16.mxu0 %v1815
    %1847 = vmatpush1.bf16.msra.mxu0 %v1814
    %1848 = vmatprep.subr.bf16.mxu0 %v1817
    %1849 = vmatpush1.bf16.msra.mxu0 %v1816
    %1850 = vmatprep.subr.bf16.mxu0 %v1819
    %1851 = vmatpush1.bf16.msra.mxu0 %v1818
    %1852 = vmatprep.subr.bf16.mxu0 %v1821
    %1853 = vmatpush1.bf16.msra.mxu0 %v1820
    %1854 = vmatprep.subr.bf16.mxu0 %v1823
    %1855 = vmatpush1.bf16.msra.mxu0 %v1822
    %1856 = vmatprep.subr.bf16.mxu0 %v1825
    %1857 = vmatpush1.bf16.msra.mxu0 %v1824
    %1858 = vmatprep.subr.bf16.mxu0 %v1827
    %1859 = vmatpush1.bf16.msra.mxu0 %v1826
    %1860 = vmatprep.subr.bf16.mxu0 %v1829
    %1861 = vmatpush1.bf16.msra.mxu0 %v1828
    %1862 = vmatprep.subr.bf16.mxu0 0
    %1863 = vmatpush1.bf16.msra.mxu0 0
    %1864 = vmatprep.subr.bf16.mxu0 0
    %1865 = vmatpush1.bf16.msra.mxu0 0
    %1866 = vmatprep.subr.bf16.mxu0 0
    %1867 = vmatpush1.bf16.msra.mxu0 0
    %1868 = vmatprep.subr.bf16.mxu0 0
    %1869 = vmatpush1.bf16.msra.mxu0 0
    %1870 = vmatprep.subr.bf16.mxu0 0
    %1871 = vmatpush1.bf16.msra.mxu0 0
    %1872 = vmatprep.subr.bf16.mxu0 0
    %1873 = vmatpush1.bf16.msra.mxu0 0
    %1874 = vmatprep.subr.bf16.mxu0 0
    %1875 = vmatpush1.bf16.msra.mxu0 0
    %1876 = vmatprep.subr.bf16.mxu0 0
    %1877 = vmatpush1.bf16.msra.mxu0 0
    %1878 = vmatprep.mubr.bf16.mxu0 0
    %1879 = vmatmul.mubr.bf16.gmra.mrb[0].mxu0 %v1749
    %v1880 = vpop.f32.mrb[0].mxu0
    %v1881 = vadd.f32 0.0, %v1880
    %v1882 = vpop.f32.mrb[0].mxu0
    %v1883 = vadd.f32 0.0, %v1882
    %v1884 = vpop.f32.mrb[0].mxu0
    %v1885 = vadd.f32 0.0, %v1884
    %v1886 = vpop.f32.mrb[0].mxu0
    %v1887 = vadd.f32 0.0, %v1886
    %1888 = vdwg.mxu0
    %v1889 = vmax.f32 %v1881, %v1883
    %1890 = vmax.xlane.f32.xlu0 %v1889
    %v1891 = vpop.xlane.xlu0 %1890
    %v1892 = vmax.f32 %v1885, %v1887
    %1893 = vmax.xlane.f32.xlu0 %v1892
    %v1894 = vpop.xlane.xlu0 %1893
    %v1895 = vcvt.s32.f32 %v145
    %v1896 = vcvt.s32.f32 %v318
    %vm1897 = vcmp.ge.f32.partialorder %v1881, %v1891
    %vm1898 = vcmp.ge.f32.partialorder %v1883, %v1891
    %vm1899 = vcmp.ge.f32.partialorder %v1885, %v1894
    %vm1900 = vcmp.ge.f32.partialorder %v1887, %v1894
    %v1901 = vsel %vm1897, %v1895, 256.0
    %v1902 = vsel %vm1898, %v1896, 256.0
    %v1903 = vsel %vm1899, %v1895, 256.0
    %v1904 = vsel %vm1900, %v1896, 256.0
    %v1905 = vmin.f32 %v1901, %v1902
    %1906 = vmin.xlane.f32.xlu0 %v1905
    %v1907 = vpop.xlane.xlu0 %1906
    %v1908 = vmin.f32 %v1903, %v1904
    %1909 = vmin.xlane.f32.xlu0 %v1908
    %v1910 = vpop.xlane.xlu0 %1909
    %v1911 = vadd.f32 %v1907, 0.5
    %v1912 = vadd.f32 %v1910, 0.5
    %v1913 = vmul.f32 %v1911, 0.1171875
    %v1914 = vmul.f32 %v1912, 0.1171875
    %v1915 = vadd.f32 %v1913, -15.0
    %v1916 = vadd.f32 %v1914, -15.0
    %v1917 = vand.u32 %v136, 7
    %v1918 = vand.u32 %v137, 7
    %vm1919 = vcmp.eq.s32.totalorder %v1917, %v145
    %vm1920 = vcmp.eq.s32.totalorder %v1918, %v145
    %v1921 = vsel %vm1919, 1, 0
    %v1922 = vsel %vm1920, 1, 0
    %v1923 = vcvt.s32.f32 %v1921
    %v1924 = vcvt.s32.f32 %v1922
    %v1925 = vshra.s32 %v145, 3
    %vm1926 = vcmp.eq.s32.totalorder %v1925, %v136
    %v1927 = vsel %vm1926, 1, 0
    %v1928 = vcvt.s32.f32 %v1927
    %v1929 = vmul.f32 %v1915, %v1923
    %v1930 = vmul.f32 %v1916, %v1924
    %v1932 = vsel %vm280, %v1928, 0
    %1934 = vmatprep.subr.mxu0 0.0
    %1935 = vmatpush1.msra.mxu0 %v1929
    %1936 = vmatprep.subr.mxu0 0.0
    %1937 = vmatpush1.msra.mxu0 %v1930
    %1938 = vmatprep.subr.mxu0 0.0
    %1939 = vmatpush1.msra.mxu0 0.0
    %1940 = vmatprep.subr.mxu0 0.0
    %1941 = vmatpush1.msra.mxu0 0.0
    %1942 = vmatprep.subr.mxu0 0.0
    %1943 = vmatpush1.msra.mxu0 0.0
    %1944 = vmatprep.subr.mxu0 0.0
    %1945 = vmatpush1.msra.mxu0 0.0
    %1946 = vmatprep.subr.mxu0 0.0
    %1947 = vmatpush1.msra.mxu0 0.0
    %1948 = vmatprep.subr.mxu0 0.0
    %1949 = vmatpush1.msra.mxu0 0.0
    %1950 = vmatprep.subr.mxu0 0.0
    %1951 = vmatpush1.msra.mxu0 0.0
    %1952 = vmatprep.subr.mxu0 0.0
    %1953 = vmatpush1.msra.mxu0 0.0
    %1954 = vmatprep.subr.mxu0 0.0
    %1955 = vmatpush1.msra.mxu0 0.0
    %1956 = vmatprep.subr.mxu0 0.0
    %1957 = vmatpush1.msra.mxu0 0.0
    %1958 = vmatprep.subr.mxu0 0.0
    %1959 = vmatpush1.msra.mxu0 0.0
    %1960 = vmatprep.subr.mxu0 0.0
    %1961 = vmatpush1.msra.mxu0 0.0
    %1962 = vmatprep.subr.mxu0 0.0
    %1963 = vmatpush1.msra.mxu0 0.0
    %1964 = vmatprep.subr.mxu0 0.0
    %1965 = vmatpush1.msra.mxu0 0.0
    %1966 = vmatprep.subr.mxu0 0.0
    %1967 = vmatpush1.msra.mxu0 0.0
    %1968 = vmatprep.subr.mxu0 0.0
    %1969 = vmatpush1.msra.mxu0 0.0
    %1970 = vmatprep.subr.mxu0 0.0
    %1971 = vmatpush1.msra.mxu0 0.0
    %1972 = vmatprep.subr.mxu0 0.0
    %1973 = vmatpush1.msra.mxu0 0.0
    %1974 = vmatprep.subr.mxu0 0.0
    %1975 = vmatpush1.msra.mxu0 0.0
    %1976 = vmatprep.subr.mxu0 0.0
    %1977 = vmatpush1.msra.mxu0 0.0
    %1978 = vmatprep.subr.mxu0 0.0
    %1979 = vmatpush1.msra.mxu0 0.0
    %1980 = vmatprep.subr.mxu0 0.0
    %1981 = vmatpush1.msra.mxu0 0.0
    %1982 = vmatprep.subr.mxu0 0.0
    %1983 = vmatpush1.msra.mxu0 0.0
    %1984 = vmatprep.subr.mxu0 0.0
    %1985 = vmatpush1.msra.mxu0 0.0
    %1986 = vmatprep.subr.mxu0 0.0
    %1987 = vmatpush1.msra.mxu0 0.0
    %1988 = vmatprep.subr.mxu0 0.0
    %1989 = vmatpush1.msra.mxu0 0.0
    %1990 = vmatprep.subr.mxu0 0.0
    %1991 = vmatpush1.msra.mxu0 0.0
    %1992 = vmatprep.subr.mxu0 0.0
    %1993 = vmatpush1.msra.mxu0 0.0
    %1994 = vmatprep.subr.mxu0 0.0
    %1995 = vmatpush1.msra.mxu0 0.0
    %1996 = vmatprep.subr.mxu0 0.0
    %1997 = vmatpush1.msra.mxu0 0.0
    %1998 = vmatprep.mubr.f32.mxu0 0.0
    %1999 = vmatmul.mubr.f32.gmra.mrb[0].mxu0 %v1932
    %v2000 = vpop.f32.mrb[0].mxu0
    %v2001 = vadd.f32 0.0, %v2000
    %v2002 = vpop.f32.mrb[0].mxu0
    %2003 = vdwg.mxu0
    %v2004 = vmul.f32 %v2001, %v132
    %vm2005 = vcmask 58368
    %2006 = vst.msk [vmem:[#allocation14] sm:$0x3] %vm2005, %v2004
    // Predicated region
    $region62: #{chronos_predict.1} parent=1 // pred_check
      _
    $region63: #{chronos_predict.1} parent=1 // pred_check_branch
      %2008 = sbr.rel (0) target = $region65
    $region64: #{chronos_predict.1} parent=1 // pred_region
      %s2010 = ssub.s32 32, 32
      %2011 = vsyncadd [#allocation4], %s2010
      %s2013 = sshll.u32 [#allocation14], 4
      %s2014 = int_to_ptr.vmem [resolvable:$true] %s2013
      %2016 = dma.vmem_to_hbm [thread:$0]  %s2014, 32, %s8, [#allocation4]
    $region65: #{chronos_predict.1} parent=1 // pred_fallthru
      _
    // Predicated region
    $region66: #{chronos_predict.1} parent=1 // pred_check
      _
    $region67: #{chronos_predict.1} parent=1 // pred_check_branch
      %2018 = sbr.rel (0) target = $region69
    $region68: #{chronos_predict.1} parent=1 // pred_region
      %2019 = dma.done [#allocation4], 32
    $region69: #{chronos_predict.1} parent=1 // pred_fallthru
      _
    %2020 = vsyncpa [#allocation3], 1
    %2021 = vsyncpa [#allocation6], 1
    %2022 = vsyncpa [#allocation9], 1
    %2023 = vsyncpa [#allocation12], 1
    %2024 = vsyncpa [#allocation4], 1

</llo_original>
